<compile_context>
chip_gen: v6e
topology: v6e:2x2x1
jax: 0.10.0
libtpu: 0.0.40
codegen_flags: <defaults>
</compile_context>

<pallas_src>
import functools
import math

import jax
import jax.numpy as jnp
from jax import lax
from jax.experimental import pallas as pl
from jax.experimental.pallas import tpu as pltpu


# ------------------------------------------------------------------ helpers

def _layernorm(v, g, b, eps=1e-5):
    mu = jnp.mean(v, axis=-1, keepdims=True)
    var = jnp.mean((v - mu) ** 2, axis=-1, keepdims=True)
    return (v - mu) * lax.rsqrt(var + eps) * g + b


# ------------------------------------------------------------------ kernel

def zero_fused_kernel(n_heads, n_layers,
                      x_ref,
                      ln1g_ref, ln1b_ref, wqkv_ref, bqkv_ref, wo_ref, bo_ref,
                      ln2g_ref, ln2b_ref, w1_ref, b1_ref, w2_ref, b2_ref,
                      lnfg_ref, lnfb_ref, wa_ref, ba_ref,
                      o_ref,
                      x_sc, attn_sc):
    """One (batch element, layer) grid step of the ZeroModel forward.

    grid = (B, L): batch axis "parallel", layer axis "arbitrary".
    x_ref    : (1, S, D)   embedded tokens for this batch element (same block for all l)
    *_ref[l] : per-layer weight tile (leading block dim 1, streamed over l)
    o_ref    : (1, S, A_pad) lane-padded logits, written only at l == L-1
    x_sc     : (S, D) f32 VMEM residual stream, persistent across the layer axis
    attn_sc  : (S, D) f32 VMEM per-head attention output staging buffer
    """
    l = pl.program_id(1)
    S, D = x_sc.shape
    hd = D // n_heads
    scale = 1.0 / math.sqrt(hd)

    @pl.when(l == 0)
    def _():
        x_sc[...] = x_ref[0].astype(jnp.float32)

    # causal additive mask generated in-kernel (cheap VALU work, no HBM traffic)
    row = lax.broadcasted_iota(jnp.int32, (S, S), 0)
    col = lax.broadcasted_iota(jnp.int32, (S, S), 1)
    bias = jnp.where(col <= row, 0.0, -1e30).astype(jnp.float32)

    x = x_sc[...]                                               # (S, D) f32

    # ---- causal multi-head self-attention (pre-LN) ----
    xn = _layernorm(x, ln1g_ref[0], ln1b_ref[0]).astype(jnp.bfloat16)
    qkv = jnp.dot(xn, wqkv_ref[0],
                  preferred_element_type=jnp.float32) + bqkv_ref[0]   # (S, 3D) f32
    q = qkv[:, :D]
    k = qkv[:, D:2 * D]
    v = qkv[:, 2 * D:]
    # TODO(synk): for long S, switch to flash-style online softmax over key tiles
    #             instead of materializing the full (S, S) score matrix.
    for h in range(n_heads):
        lo = h * hd
        qh = q[:, lo:lo + hd].astype(jnp.bfloat16)
        kh = k[:, lo:lo + hd].astype(jnp.bfloat16)
        vh = v[:, lo:lo + hd].astype(jnp.bfloat16)
        s = jnp.dot(qh, kh.T, preferred_element_type=jnp.float32) * scale + bias
        s = s - jnp.max(s, axis=-1, keepdims=True)
        p = jnp.exp(s)
        p = p * pl.reciprocal(jnp.sum(p, axis=-1, keepdims=True), approx=True)
        oh = jnp.dot(p.astype(jnp.bfloat16), vh,
                     preferred_element_type=jnp.float32)              # (S, hd)
        attn_sc[:, lo:lo + hd] = oh
    # single full-D contraction through Wo (no per-head (hd,D) folds / concat)
    attn = jnp.dot(attn_sc[...].astype(jnp.bfloat16), wo_ref[0],
                   preferred_element_type=jnp.float32) + bo_ref[0]
    x = x + attn

    # ---- MLP (pre-LN, GELU) ----
    xn2 = _layernorm(x, ln2g_ref[0], ln2b_ref[0]).astype(jnp.bfloat16)
    h1 = jnp.dot(xn2, w1_ref[0],
                 preferred_element_type=jnp.float32) + b1_ref[0]
    # TODO(synk): torch.nn.GELU defaults to exact erf; tanh approximation used here.
    h1 = jax.nn.gelu(h1, approximate=True)
    x = x + jnp.dot(h1.astype(jnp.bfloat16), w2_ref[0],
                    preferred_element_type=jnp.float32) + b2_ref[0]

    x_sc[...] = x

    # ---- final LayerNorm + ActionHead (lane-dense padded output) ----
    @pl.when(l == n_layers - 1)
    def _():
        xf = _layernorm(x_sc[...], lnfg_ref[...], lnfb_ref[...]).astype(jnp.bfloat16)
        logits = jnp.dot(xf, wa_ref[...],
                         preferred_element_type=jnp.float32) + ba_ref[...]
        o_ref[0] = logits.astype(o_ref.dtype)


# ------------------------------------------------------------------ wrapper

def zero_model_forward(tokens, params, n_heads):
    B, S = tokens.shape
    D = params["tok_emb"].shape[1]
    A = params["wa"].shape[1]
    L = len(params["layers"])
    F = params["layers"][0]["w1"].shape[1]
    A_pad = ((A + 127) // 128) * 128

    # TODO(synk): token-embedding gather + positional add is left to XLA (tiny op);
    #             could be folded in via scalar-prefetch row gather if it mattered.
    x = (params["tok_emb"][tokens] + params["pos_emb"][:S][None, :, :]).astype(jnp.float32)

    def stack(name, dt):
        return jnp.stack([lp[name].astype(dt) for lp in params["layers"]])

    # bf16 for matmul weights (MXU inputs), f32 for LN params and biases.
    ln1g = stack("ln1_g", jnp.float32)   # (L, 1, D)
    ln1b = stack("ln1_b", jnp.float32)
    wqkv = stack("wqkv", jnp.bfloat16)   # (L, D, 3D)
    bqkv = stack("bqkv", jnp.float32)    # (L, 1, 3D)
    wo = stack("wo", jnp.bfloat16)       # (L, D, D)
    bo = stack("bo", jnp.float32)        # (L, 1, D)
    ln2g = stack("ln2_g", jnp.float32)
    ln2b = stack("ln2_b", jnp.float32)
    w1 = stack("w1", jnp.bfloat16)       # (L, D, F)
    b1 = stack("b1", jnp.float32)        # (L, 1, F)
    w2 = stack("w2", jnp.bfloat16)       # (L, F, D)
    b2 = stack("b2", jnp.float32)        # (L, 1, D)
    lnfg = params["lnf_g"].astype(jnp.float32)                       # (1, D)
    lnfb = params["lnf_b"].astype(jnp.float32)
    wa = jnp.pad(params["wa"], ((0, 0), (0, A_pad - A))).astype(jnp.bfloat16)
    ba = jnp.pad(params["ba"], ((0, 0), (0, A_pad - A))).astype(jnp.float32)

    lidx = lambda b, l: (l, 0, 0)    # per-layer streamed weight tiles
    bidx = lambda b, l: (b, 0, 0)    # per-batch activation / output tiles
    gidx = lambda b, l: (0, 0)       # small globals (final LN / head), VMEM resident

    in_specs = [
        pl.BlockSpec((1, S, D), bidx),          # x
        pl.BlockSpec((1, 1, D), lidx),          # ln1_g
        pl.BlockSpec((1, 1, D), lidx),          # ln1_b
        pl.BlockSpec((1, D, 3 * D), lidx),      # wqkv
        pl.BlockSpec((1, 1, 3 * D), lidx),      # bqkv
        pl.BlockSpec((1, D, D), lidx),          # wo
        pl.BlockSpec((1, 1, D), lidx),          # bo
        pl.BlockSpec((1, 1, D), lidx),          # ln2_g
        pl.BlockSpec((1, 1, D), lidx),          # ln2_b
        pl.BlockSpec((1, D, F), lidx),          # w1
        pl.BlockSpec((1, 1, F), lidx),          # b1
        pl.BlockSpec((1, F, D), lidx),          # w2
        pl.BlockSpec((1, 1, D), lidx),          # b2
        pl.BlockSpec((1, D), gidx),             # lnf_g
        pl.BlockSpec((1, D), gidx),             # lnf_b
        pl.BlockSpec((D, A_pad), gidx),         # wa (padded)
        pl.BlockSpec((1, A_pad), gidx),         # ba (padded)
    ]
    out_specs = pl.BlockSpec((1, S, A_pad), bidx)

    operands = [x, ln1g, ln1b, wqkv, bqkv, wo, bo, ln2g, ln2b,
                w1, b1, w2, b2, lnfg, lnfb, wa, ba]

    # advisory cost estimate so XLA schedules the surrounding ops sensibly
    flops_layer = 2 * S * D * 3 * D + 4 * S * S * D + 2 * S * D * D + 4 * S * D * F
    flops = B * L * flops_layer + B * 2 * S * D * A_pad
    transcendentals = B * L * (n_heads * S * S + S * F)
    bytes_accessed = int(sum(o.size * o.dtype.itemsize for o in operands)
                         + B * S * A_pad * 4)

    kernel = functools.partial(zero_fused_kernel, n_heads, L)
    out = pl.pallas_call(
        kernel,
        out_shape=jax.ShapeDtypeStruct((B, S, A_pad), jnp.float32),
        grid_spec=pltpu.PrefetchScalarGridSpec(
            num_scalar_prefetch=0,
            grid=(B, L),
            in_specs=in_specs,
            out_specs=out_specs,
            scratch_shapes=[pltpu.VMEM((S, D), jnp.float32),   # residual stream
                            pltpu.VMEM((S, D), jnp.float32)],  # per-head attn staging
        ),
        compiler_params=pltpu.CompilerParams(
            dimension_semantics=("parallel", "arbitrary"),
            # explicit scoped-VMEM budget (defaults are 16/32 MiB on v5e/v6e)
            vmem_limit_bytes=64 * 1024 * 1024),
        cost_estimate=pl.CostEstimate(flops=int(flops),
                                      transcendentals=int(transcendentals),
                                      bytes_accessed=bytes_accessed),
    )(*operands)

    return out[:, :, :A]


# ------------------------------------------------------------------ reference (pure JAX)

def reference_forward(tokens, params, n_heads, matmul_dtype=jnp.float32):
    """Pure-JAX reference; matmul_dtype selects the MXU-input precision so the
    kernel's bf16-at-matmul-inputs convention can be checked tightly."""
    B, S = tokens.shape
    D = params["tok_emb"].shape[1]
    hd = D // n_heads

    def mm(a, w):
        return jnp.dot(a.astype(matmul_dtype), w.astype(matmul_dtype),
                       preferred_element_type=jnp.float32)

    x = params["tok_emb"][tokens] + params["pos_emb"][:S][None, :, :]
    causal = jnp.tril(jnp.ones((S, S), bool))
    for lp in params["layers"]:
        xn = _layernorm(x, lp["ln1_g"], lp["ln1_b"])
        qkv = mm(xn, lp["wqkv"]) + lp["bqkv"]
        q, k, v = jnp.split(qkv, 3, axis=-1)
        q = q.reshape(B, S, n_heads, hd).astype(matmul_dtype)
        k = k.reshape(B, S, n_heads, hd).astype(matmul_dtype)
        v = v.reshape(B, S, n_heads, hd).astype(matmul_dtype)
        s = jnp.einsum("bqhd,bkhd->bhqk", q, k,
                       preferred_element_type=jnp.float32) / math.sqrt(hd)
        s = jnp.where(causal[None, None], s, -1e30)
        p = jax.nn.softmax(s, axis=-1)
        o = jnp.einsum("bhqk,bkhd->bqhd", p.astype(matmul_dtype), v,
                       preferred_element_type=jnp.float32).reshape(B, S, D)
        x = x + mm(o, lp["wo"]) + lp["bo"]
        xn2 = _layernorm(x, lp["ln2_g"], lp["ln2_b"])
        h1 = jax.nn.gelu(mm(xn2, lp["w1"]) + lp["b1"], approximate=True)
        x = x + mm(h1, lp["w2"]) + lp["b2"]
    xf = _layernorm(x, params["lnf_g"], params["lnf_b"])
    return mm(xf, params["wa"]) + params["ba"]


# ------------------------------------------------------------------ params

def init_params(key, *, vocab, max_seq, d_model, d_ff, n_layers, n_actions):
    keys = iter(jax.random.split(key, 3 + 4 * n_layers))

    def nrm(k, shape, scale=0.02):
        return (scale * jax.random.normal(k, shape)).astype(jnp.float32)

    params = {
        "tok_emb": nrm(next(keys), (vocab, d_model)),
        "pos_emb": nrm(next(keys), (max_seq, d_model)),
        "lnf_g": jnp.ones((1, d_model), jnp.float32),
        "lnf_b": jnp.zeros((1, d_model), jnp.float32),
        "wa": nrm(next(keys), (d_model, n_actions)),
        "ba": jnp.zeros((1, n_actions), jnp.float32),
        "layers": [],
    }
    for _ in range(n_layers):
        params["layers"].append({
            "ln1_g": jnp.ones((1, d_model), jnp.float32),
            "ln1_b": jnp.zeros((1, d_model), jnp.float32),
            "wqkv": nrm(next(keys), (d_model, 3 * d_model)),
            "bqkv": jnp.zeros((1, 3 * d_model), jnp.float32),
            "wo": nrm(next(keys), (d_model, d_model)),
            "bo": jnp.zeros((1, d_model), jnp.float32),
            "ln2_g": jnp.ones((1, d_model), jnp.float32),
            "ln2_b": jnp.zeros((1, d_model), jnp.float32),
            "w1": nrm(next(keys), (d_model, d_ff)),
            "b1": jnp.zeros((1, d_ff), jnp.float32),
            "w2": nrm(next(keys), (d_ff, d_model)),
            "b2": jnp.zeros((1, d_model), jnp.float32),
        })
    return params


# ------------------------------------------------------------------ main

if __name__ == "__main__":
    config = dict(vocab=32, max_seq=8, d_model=32, n_heads=4,
                  d_ff=64, n_layers=2, n_actions=8)
    B, S = 2, 8

    key = jax.random.PRNGKey(0)
    pkey, xkey = jax.random.split(key)
    params = init_params(pkey,
                         vocab=config["vocab"], max_seq=config["max_seq"],
                         d_model=config["d_model"], d_ff=config["d_ff"],
                         n_layers=config["n_layers"],
                         n_actions=config["n_actions"])
    tokens = jax.random.randint(xkey, (B, S), 0, config["vocab"], dtype=jnp.int32)

    fwd = jax.jit(functools.partial(zero_model_forward, n_heads=config["n_heads"]))
    logits = fwd(tokens, params)
    jax.block_until_ready(logits)

    assert logits.shape == (B, S, config["n_actions"]), logits.shape
    assert bool(jnp.all(jnp.isfinite(logits)))

    # check against a reference using the same bf16-at-MXU-inputs convention
    ref = reference_forward(tokens, params, config["n_heads"],
                            matmul_dtype=jnp.bfloat16)
    max_err = float(jnp.max(jnp.abs(logits - ref)))
    assert max_err < 2e-2, f"max abs error vs reference: {max_err}"
    print("KERNEL_OK")
</pallas_src>

<mosaic_0001>
module attributes {stable_mosaic.version = 11 : i64} {
  func.func @zero_fused_kernel(%arg0: i32, %arg1: i32, %arg2: memref<1x8x32xf32, #tpu.memory_space<vmem>>, %arg3: memref<1x1x32xf32, #tpu.memory_space<vmem>>, %arg4: memref<1x1x32xf32, #tpu.memory_space<vmem>>, %arg5: memref<1x32x96xbf16, #tpu.memory_space<vmem>>, %arg6: memref<1x1x96xf32, #tpu.memory_space<vmem>>, %arg7: memref<1x32x32xbf16, #tpu.memory_space<vmem>>, %arg8: memref<1x1x32xf32, #tpu.memory_space<vmem>>, %arg9: memref<1x1x32xf32, #tpu.memory_space<vmem>>, %arg10: memref<1x1x32xf32, #tpu.memory_space<vmem>>, %arg11: memref<1x32x64xbf16, #tpu.memory_space<vmem>>, %arg12: memref<1x1x64xf32, #tpu.memory_space<vmem>>, %arg13: memref<1x64x32xbf16, #tpu.memory_space<vmem>>, %arg14: memref<1x1x32xf32, #tpu.memory_space<vmem>>, %arg15: memref<1x32xf32, #tpu.memory_space<vmem>>, %arg16: memref<1x32xf32, #tpu.memory_space<vmem>>, %arg17: memref<32x128xbf16, #tpu.memory_space<vmem>>, %arg18: memref<1x128xf32, #tpu.memory_space<vmem>>, %arg19: memref<1x8x128xf32, #tpu.memory_space<vmem>>, %arg20: memref<8x32xf32, #tpu.memory_space<vmem>>, %arg21: memref<8x32xf32, #tpu.memory_space<vmem>>) attributes {dimension_semantics = [#tpu.dimension_semantics<parallel>, #tpu.dimension_semantics<arbitrary>], iteration_bounds = array<i64: 2, 2>, scalar_prefetch = 0 : i64, scratch_operands = 2 : i64, tpu.core_type = #tpu.core_type<tc>, window_params = [{transform_indices = @transform_0, window_bounds = array<i64: 1, 8, 32>}, {transform_indices = @transform_1, window_bounds = array<i64: 1, 1, 32>}, {transform_indices = @transform_2, window_bounds = array<i64: 1, 1, 32>}, {transform_indices = @transform_3, window_bounds = array<i64: 1, 32, 96>}, {transform_indices = @transform_4, window_bounds = array<i64: 1, 1, 96>}, {transform_indices = @transform_5, window_bounds = array<i64: 1, 32, 32>}, {transform_indices = @transform_6, window_bounds = array<i64: 1, 1, 32>}, {transform_indices = @transform_7, window_bounds = array<i64: 1, 1, 32>}, {transform_indices = @transform_8, window_bounds = array<i64: 1, 1, 32>}, {transform_indices = @transform_9, window_bounds = array<i64: 1, 32, 64>}, {transform_indices = @transform_10, window_bounds = array<i64: 1, 1, 64>}, {transform_indices = @transform_11, window_bounds = array<i64: 1, 64, 32>}, {transform_indices = @transform_12, window_bounds = array<i64: 1, 1, 32>}, {pipeline_mode = #tpu.pipeline_mode<synchronous>, transform_indices = @transform_13, window_bounds = array<i64: 1, 32>}, {pipeline_mode = #tpu.pipeline_mode<synchronous>, transform_indices = @transform_14, window_bounds = array<i64: 1, 32>}, {pipeline_mode = #tpu.pipeline_mode<synchronous>, transform_indices = @transform_15, window_bounds = array<i64: 32, 128>}, {pipeline_mode = #tpu.pipeline_mode<synchronous>, transform_indices = @transform_16, window_bounds = array<i64: 1, 128>}, {transform_indices = @transform_17, window_bounds = array<i64: 1, 8, 128>}]} {
    %c0_i32 = arith.constant 0 : i32
    %0 = arith.cmpi eq, %arg1, %c0_i32 : i32
    %1 = arith.extui %0 : i1 to i32
    %c0_i32_0 = arith.constant 0 : i32
    %2 = arith.cmpi ne, %1, %c0_i32_0 : i32
    scf.if %2 {
      %c0_87 = arith.constant 0 : index
      %c0_88 = arith.constant 0 : index
      %c0_89 = arith.constant 0 : index
      %213 = vector.load %arg2[%c0_87, %c0_88, %c0_89] : memref<1x8x32xf32, #tpu.memory_space<vmem>>, vector<1x8x32xf32>
      %214 = vector.shape_cast %213 : vector<1x8x32xf32> to vector<8x32xf32>
      %c0_90 = arith.constant 0 : index
      %c0_91 = arith.constant 0 : index
      %215 = vector.load %arg20[%c0_90, %c0_91] : memref<8x32xf32, #tpu.memory_space<vmem>>, vector<8x32xf32>
      tpu.vector_store %arg20[%c0_90, %c0_91], %214 {strides = array<i32>} : memref<8x32xf32, #tpu.memory_space<vmem>>, vector<8x32xf32>,
    } else {
    }
    %3 = tpu.iota {dimensions = array<i32: 0>} : vector<8x8xi32>
    %4 = tpu.iota {dimensions = array<i32: 1>} : vector<8x8xi32>
    %5 = arith.cmpi sle, %4, %3 : vector<8x8xi32>
    %cst = arith.constant 0.000000e+00 : f32
    %cst_1 = arith.constant -1.000000e+30 : f32
    %6 = vector.broadcast %cst : f32 to vector<8x8xf32>
    %7 = vector.broadcast %cst_1 : f32 to vector<8x8xf32>
    %8 = arith.select %5, %6, %7 : vector<8x8xi1>, vector<8x8xf32>
    %c0 = arith.constant 0 : index
    %c0_2 = arith.constant 0 : index
    %9 = vector.load %arg20[%c0, %c0_2] : memref<8x32xf32, #tpu.memory_space<vmem>>, vector<8x32xf32>
    %c0_3 = arith.constant 0 : index
    %c0_4 = arith.constant 0 : index
    %c0_5 = arith.constant 0 : index
    %10 = vector.load %arg3[%c0_3, %c0_4, %c0_5] : memref<1x1x32xf32, #tpu.memory_space<vmem>>, vector<1x1x32xf32>
    %11 = vector.shape_cast %10 : vector<1x1x32xf32> to vector<1x32xf32>
    %c0_6 = arith.constant 0 : index
    %c0_7 = arith.constant 0 : index
    %c0_8 = arith.constant 0 : index
    %12 = vector.load %arg4[%c0_6, %c0_7, %c0_8] : memref<1x1x32xf32, #tpu.memory_space<vmem>>, vector<1x1x32xf32>
    %13 = vector.shape_cast %12 : vector<1x1x32xf32> to vector<1x32xf32>
    %cst_9 = arith.constant dense<0.000000e+00> : vector<8xf32>
    %14 = vector.multi_reduction <add>, %9, %cst_9 [1] : vector<8x32xf32> to vector<8xf32>
    %15 = vector.shape_cast %14 : vector<8xf32> to vector<8x1xf32>
    %cst_10 = arith.constant 3.200000e+01 : f32
    %16 = vector.broadcast %cst_10 : f32 to vector<8x1xf32>
    %17 = arith.divf %15, %16 : vector<8x1xf32>
    %18 = vector.broadcast %17 : vector<8x1xf32> to vector<8x32xf32>
    %19 = arith.subf %9, %18 : vector<8x32xf32>
    %20 = arith.mulf %19, %19 : vector<8x32xf32>
    %cst_11 = arith.constant dense<0.000000e+00> : vector<8xf32>
    %21 = vector.multi_reduction <add>, %20, %cst_11 [1] : vector<8x32xf32> to vector<8xf32>
    %22 = vector.shape_cast %21 : vector<8xf32> to vector<8x1xf32>
    %cst_12 = arith.constant 3.200000e+01 : f32
    %23 = vector.broadcast %cst_12 : f32 to vector<8x1xf32>
    %24 = arith.divf %22, %23 : vector<8x1xf32>
    %25 = vector.broadcast %17 : vector<8x1xf32> to vector<8x32xf32>
    %26 = arith.subf %9, %25 : vector<8x32xf32>
    %cst_13 = arith.constant 9.99999974E-6 : f32
    %27 = vector.broadcast %cst_13 : f32 to vector<8x1xf32>
    %28 = arith.addf %24, %27 : vector<8x1xf32>
    %29 = math.rsqrt %28 : vector<8x1xf32>
    %30 = vector.broadcast %29 : vector<8x1xf32> to vector<8x32xf32>
    %31 = arith.mulf %26, %30 : vector<8x32xf32>
    %32 = vector.broadcast %11 : vector<1x32xf32> to vector<8x32xf32>
    %33 = arith.mulf %31, %32 : vector<8x32xf32>
    %34 = vector.broadcast %13 : vector<1x32xf32> to vector<8x32xf32>
    %35 = arith.addf %33, %34 : vector<8x32xf32>
    %36 = arith.truncf %35 : vector<8x32xf32> to vector<8x32xbf16>
    %c0_14 = arith.constant 0 : index
    %c0_15 = arith.constant 0 : index
    %c0_16 = arith.constant 0 : index
    %37 = vector.load %arg5[%c0_14, %c0_15, %c0_16] : memref<1x32x96xbf16, #tpu.memory_space<vmem>>, vector<1x32x96xbf16>
    %38 = vector.shape_cast %37 : vector<1x32x96xbf16> to vector<32x96xbf16>
    %cst_17 = arith.constant dense<0.000000e+00> : vector<8x96xf32>
    %39 = tpu.matmul %36, %38, %cst_17 {dimension_numbers = #tpu.dot_dimension_numbers<[1], [0], [0], [1], [0, 0, 1, 1], [], []>} : vector<8x32xbf16>, vector<32x96xbf16>, vector<8x96xf32> -> vector<8x96xf32>
    %c0_18 = arith.constant 0 : index
    %c0_19 = arith.constant 0 : index
    %c0_20 = arith.constant 0 : index
    %40 = vector.load %arg6[%c0_18, %c0_19, %c0_20] : memref<1x1x96xf32, #tpu.memory_space<vmem>>, vector<1x1x96xf32>
    %41 = vector.shape_cast %40 : vector<1x1x96xf32> to vector<1x96xf32>
    %42 = vector.broadcast %41 : vector<1x96xf32> to vector<8x96xf32>
    %43 = arith.addf %39, %42 : vector<8x96xf32>
    %44 = vector.extract_strided_slice %43 {offsets = [0, 0], sizes = [8, 32], strides = [1, 1]} : vector<8x96xf32> to vector<8x32xf32>
    %45 = vector.extract_strided_slice %43 {offsets = [0, 32], sizes = [8, 32], strides = [1, 1]} : vector<8x96xf32> to vector<8x32xf32>
    %46 = vector.extract_strided_slice %43 {offsets = [0, 64], sizes = [8, 32], strides = [1, 1]} : vector<8x96xf32> to vector<8x32xf32>
    %47 = vector.extract_strided_slice %44 {offsets = [0, 0], sizes = [8, 8], strides = [1, 1]} : vector<8x32xf32> to vector<8x8xf32>
    %48 = arith.truncf %47 : vector<8x8xf32> to vector<8x8xbf16>
    %49 = vector.extract_strided_slice %45 {offsets = [0, 0], sizes = [8, 8], strides = [1, 1]} : vector<8x32xf32> to vector<8x8xf32>
    %50 = arith.truncf %49 : vector<8x8xf32> to vector<8x8xbf16>
    %51 = vector.extract_strided_slice %46 {offsets = [0, 0], sizes = [8, 8], strides = [1, 1]} : vector<8x32xf32> to vector<8x8xf32>
    %52 = arith.truncf %51 : vector<8x8xf32> to vector<8x8xbf16>
    %53 = tpu.transpose %50, [1, 0] : vector<8x8xbf16> -> vector<8x8xbf16>
    %cst_21 = arith.constant dense<0.000000e+00> : vector<8x8xf32>
    %54 = tpu.matmul %48, %53, %cst_21 {dimension_numbers = #tpu.dot_dimension_numbers<[1], [0], [0], [1], [0, 0, 1, 1], [], []>} : vector<8x8xbf16>, vector<8x8xbf16>, vector<8x8xf32> -> vector<8x8xf32>
    %cst_22 = arith.constant 0.353553385 : f32
    %55 = vector.broadcast %cst_22 : f32 to vector<8x8xf32>
    %56 = arith.mulf %54, %55 : vector<8x8xf32>
    %57 = arith.addf %56, %8 : vector<8x8xf32>
    %cst_23 = arith.constant dense<0xFF800000> : vector<8xf32>
    %58 = vector.multi_reduction <maximumf>, %57, %cst_23 [1] : vector<8x8xf32> to vector<8xf32>
    %59 = vector.shape_cast %58 : vector<8xf32> to vector<8x1xf32>
    %60 = vector.broadcast %59 : vector<8x1xf32> to vector<8x8xf32>
    %61 = arith.subf %57, %60 : vector<8x8xf32>
    %62 = math.exp %61 : vector<8x8xf32>
    %cst_24 = arith.constant dense<0.000000e+00> : vector<8xf32>
    %63 = vector.multi_reduction <add>, %62, %cst_24 [1] : vector<8x8xf32> to vector<8xf32>
    %64 = vector.shape_cast %63 : vector<8xf32> to vector<8x1xf32>
    %65 = tpu.reciprocal %64 {approx = true} : vector<8x1xf32> -> vector<8x1xf32>
    %66 = vector.broadcast %65 : vector<8x1xf32> to vector<8x8xf32>
    %67 = arith.mulf %62, %66 : vector<8x8xf32>
    %68 = arith.truncf %67 : vector<8x8xf32> to vector<8x8xbf16>
    %cst_25 = arith.constant dense<0.000000e+00> : vector<8x8xf32>
    %69 = tpu.matmul %68, %52, %cst_25 {dimension_numbers = #tpu.dot_dimension_numbers<[1], [0], [0], [1], [0, 0, 1, 1], [], []>} : vector<8x8xbf16>, vector<8x8xbf16>, vector<8x8xf32> -> vector<8x8xf32>
    %c0_26 = arith.constant 0 : index
    %c0_27 = arith.constant 0 : index
    %70 = vector.load %arg21[%c0_26, %c0_27] : memref<8x32xf32, #tpu.memory_space<vmem>>, vector<8x8xf32>
    tpu.vector_store %arg21[%c0_26, %c0_27], %69 {strides = array<i32>} : memref<8x32xf32, #tpu.memory_space<vmem>>, vector<8x8xf32>,
    %71 = vector.extract_strided_slice %44 {offsets = [0, 8], sizes = [8, 8], strides = [1, 1]} : vector<8x32xf32> to vector<8x8xf32>
    %72 = arith.truncf %71 : vector<8x8xf32> to vector<8x8xbf16>
    %73 = vector.extract_strided_slice %45 {offsets = [0, 8], sizes = [8, 8], strides = [1, 1]} : vector<8x32xf32> to vector<8x8xf32>
    %74 = arith.truncf %73 : vector<8x8xf32> to vector<8x8xbf16>
    %75 = vector.extract_strided_slice %46 {offsets = [0, 8], sizes = [8, 8], strides = [1, 1]} : vector<8x32xf32> to vector<8x8xf32>
    %76 = arith.truncf %75 : vector<8x8xf32> to vector<8x8xbf16>
    %77 = tpu.transpose %74, [1, 0] : vector<8x8xbf16> -> vector<8x8xbf16>
    %cst_28 = arith.constant dense<0.000000e+00> : vector<8x8xf32>
    %78 = tpu.matmul %72, %77, %cst_28 {dimension_numbers = #tpu.dot_dimension_numbers<[1], [0], [0], [1], [0, 0, 1, 1], [], []>} : vector<8x8xbf16>, vector<8x8xbf16>, vector<8x8xf32> -> vector<8x8xf32>
    %cst_29 = arith.constant 0.353553385 : f32
    %79 = vector.broadcast %cst_29 : f32 to vector<8x8xf32>
    %80 = arith.mulf %78, %79 : vector<8x8xf32>
    %81 = arith.addf %80, %8 : vector<8x8xf32>
    %cst_30 = arith.constant dense<0xFF800000> : vector<8xf32>
    %82 = vector.multi_reduction <maximumf>, %81, %cst_30 [1] : vector<8x8xf32> to vector<8xf32>
    %83 = vector.shape_cast %82 : vector<8xf32> to vector<8x1xf32>
    %84 = vector.broadcast %83 : vector<8x1xf32> to vector<8x8xf32>
    %85 = arith.subf %81, %84 : vector<8x8xf32>
    %86 = math.exp %85 : vector<8x8xf32>
    %cst_31 = arith.constant dense<0.000000e+00> : vector<8xf32>
    %87 = vector.multi_reduction <add>, %86, %cst_31 [1] : vector<8x8xf32> to vector<8xf32>
    %88 = vector.shape_cast %87 : vector<8xf32> to vector<8x1xf32>
    %89 = tpu.reciprocal %88 {approx = true} : vector<8x1xf32> -> vector<8x1xf32>
    %90 = vector.broadcast %89 : vector<8x1xf32> to vector<8x8xf32>
    %91 = arith.mulf %86, %90 : vector<8x8xf32>
    %92 = arith.truncf %91 : vector<8x8xf32> to vector<8x8xbf16>
    %cst_32 = arith.constant dense<0.000000e+00> : vector<8x8xf32>
    %93 = tpu.matmul %92, %76, %cst_32 {dimension_numbers = #tpu.dot_dimension_numbers<[1], [0], [0], [1], [0, 0, 1, 1], [], []>} : vector<8x8xbf16>, vector<8x8xbf16>, vector<8x8xf32> -> vector<8x8xf32>
    %c0_33 = arith.constant 0 : index
    %c8 = arith.constant 8 : index
    %94 = vector.load %arg21[%c0_33, %c8] : memref<8x32xf32, #tpu.memory_space<vmem>>, vector<8x8xf32>
    tpu.vector_store %arg21[%c0_33, %c8], %93 {strides = array<i32>} : memref<8x32xf32, #tpu.memory_space<vmem>>, vector<8x8xf32>,
    %95 = vector.extract_strided_slice %44 {offsets = [0, 16], sizes = [8, 8], strides = [1, 1]} : vector<8x32xf32> to vector<8x8xf32>
    %96 = arith.truncf %95 : vector<8x8xf32> to vector<8x8xbf16>
    %97 = vector.extract_strided_slice %45 {offsets = [0, 16], sizes = [8, 8], strides = [1, 1]} : vector<8x32xf32> to vector<8x8xf32>
    %98 = arith.truncf %97 : vector<8x8xf32> to vector<8x8xbf16>
    %99 = vector.extract_strided_slice %46 {offsets = [0, 16], sizes = [8, 8], strides = [1, 1]} : vector<8x32xf32> to vector<8x8xf32>
    %100 = arith.truncf %99 : vector<8x8xf32> to vector<8x8xbf16>
    %101 = tpu.transpose %98, [1, 0] : vector<8x8xbf16> -> vector<8x8xbf16>
    %cst_34 = arith.constant dense<0.000000e+00> : vector<8x8xf32>
    %102 = tpu.matmul %96, %101, %cst_34 {dimension_numbers = #tpu.dot_dimension_numbers<[1], [0], [0], [1], [0, 0, 1, 1], [], []>} : vector<8x8xbf16>, vector<8x8xbf16>, vector<8x8xf32> -> vector<8x8xf32>
    %cst_35 = arith.constant 0.353553385 : f32
    %103 = vector.broadcast %cst_35 : f32 to vector<8x8xf32>
    %104 = arith.mulf %102, %103 : vector<8x8xf32>
    %105 = arith.addf %104, %8 : vector<8x8xf32>
    %cst_36 = arith.constant dense<0xFF800000> : vector<8xf32>
    %106 = vector.multi_reduction <maximumf>, %105, %cst_36 [1] : vector<8x8xf32> to vector<8xf32>
    %107 = vector.shape_cast %106 : vector<8xf32> to vector<8x1xf32>
    %108 = vector.broadcast %107 : vector<8x1xf32> to vector<8x8xf32>
    %109 = arith.subf %105, %108 : vector<8x8xf32>
    %110 = math.exp %109 : vector<8x8xf32>
    %cst_37 = arith.constant dense<0.000000e+00> : vector<8xf32>
    %111 = vector.multi_reduction <add>, %110, %cst_37 [1] : vector<8x8xf32> to vector<8xf32>
    %112 = vector.shape_cast %111 : vector<8xf32> to vector<8x1xf32>
    %113 = tpu.reciprocal %112 {approx = true} : vector<8x1xf32> -> vector<8x1xf32>
    %114 = vector.broadcast %113 : vector<8x1xf32> to vector<8x8xf32>
    %115 = arith.mulf %110, %114 : vector<8x8xf32>
    %116 = arith.truncf %115 : vector<8x8xf32> to vector<8x8xbf16>
    %cst_38 = arith.constant dense<0.000000e+00> : vector<8x8xf32>
    %117 = tpu.matmul %116, %100, %cst_38 {dimension_numbers = #tpu.dot_dimension_numbers<[1], [0], [0], [1], [0, 0, 1, 1], [], []>} : vector<8x8xbf16>, vector<8x8xbf16>, vector<8x8xf32> -> vector<8x8xf32>
    %c0_39 = arith.constant 0 : index
    %c16 = arith.constant 16 : index
    %118 = vector.load %arg21[%c0_39, %c16] : memref<8x32xf32, #tpu.memory_space<vmem>>, vector<8x8xf32>
    tpu.vector_store %arg21[%c0_39, %c16], %117 {strides = array<i32>} : memref<8x32xf32, #tpu.memory_space<vmem>>, vector<8x8xf32>,
    %119 = vector.extract_strided_slice %44 {offsets = [0, 24], sizes = [8, 8], strides = [1, 1]} : vector<8x32xf32> to vector<8x8xf32>
    %120 = arith.truncf %119 : vector<8x8xf32> to vector<8x8xbf16>
    %121 = vector.extract_strided_slice %45 {offsets = [0, 24], sizes = [8, 8], strides = [1, 1]} : vector<8x32xf32> to vector<8x8xf32>
    %122 = arith.truncf %121 : vector<8x8xf32> to vector<8x8xbf16>
    %123 = vector.extract_strided_slice %46 {offsets = [0, 24], sizes = [8, 8], strides = [1, 1]} : vector<8x32xf32> to vector<8x8xf32>
    %124 = arith.truncf %123 : vector<8x8xf32> to vector<8x8xbf16>
    %125 = tpu.transpose %122, [1, 0] : vector<8x8xbf16> -> vector<8x8xbf16>
    %cst_40 = arith.constant dense<0.000000e+00> : vector<8x8xf32>
    %126 = tpu.matmul %120, %125, %cst_40 {dimension_numbers = #tpu.dot_dimension_numbers<[1], [0], [0], [1], [0, 0, 1, 1], [], []>} : vector<8x8xbf16>, vector<8x8xbf16>, vector<8x8xf32> -> vector<8x8xf32>
    %cst_41 = arith.constant 0.353553385 : f32
    %127 = vector.broadcast %cst_41 : f32 to vector<8x8xf32>
    %128 = arith.mulf %126, %127 : vector<8x8xf32>
    %129 = arith.addf %128, %8 : vector<8x8xf32>
    %cst_42 = arith.constant dense<0xFF800000> : vector<8xf32>
    %130 = vector.multi_reduction <maximumf>, %129, %cst_42 [1] : vector<8x8xf32> to vector<8xf32>
    %131 = vector.shape_cast %130 : vector<8xf32> to vector<8x1xf32>
    %132 = vector.broadcast %131 : vector<8x1xf32> to vector<8x8xf32>
    %133 = arith.subf %129, %132 : vector<8x8xf32>
    %134 = math.exp %133 : vector<8x8xf32>
    %cst_43 = arith.constant dense<0.000000e+00> : vector<8xf32>
    %135 = vector.multi_reduction <add>, %134, %cst_43 [1] : vector<8x8xf32> to vector<8xf32>
    %136 = vector.shape_cast %135 : vector<8xf32> to vector<8x1xf32>
    %137 = tpu.reciprocal %136 {approx = true} : vector<8x1xf32> -> vector<8x1xf32>
    %138 = vector.broadcast %137 : vector<8x1xf32> to vector<8x8xf32>
    %139 = arith.mulf %134, %138 : vector<8x8xf32>
    %140 = arith.truncf %139 : vector<8x8xf32> to vector<8x8xbf16>
    %cst_44 = arith.constant dense<0.000000e+00> : vector<8x8xf32>
    %141 = tpu.matmul %140, %124, %cst_44 {dimension_numbers = #tpu.dot_dimension_numbers<[1], [0], [0], [1], [0, 0, 1, 1], [], []>} : vector<8x8xbf16>, vector<8x8xbf16>, vector<8x8xf32> -> vector<8x8xf32>
    %c0_45 = arith.constant 0 : index
    %c24 = arith.constant 24 : index
    %142 = vector.load %arg21[%c0_45, %c24] : memref<8x32xf32, #tpu.memory_space<vmem>>, vector<8x8xf32>
    tpu.vector_store %arg21[%c0_45, %c24], %141 {strides = array<i32>} : memref<8x32xf32, #tpu.memory_space<vmem>>, vector<8x8xf32>,
    %c0_46 = arith.constant 0 : index
    %c0_47 = arith.constant 0 : index
    %143 = vector.load %arg21[%c0_46, %c0_47] : memref<8x32xf32, #tpu.memory_space<vmem>>, vector<8x32xf32>
    %144 = arith.truncf %143 : vector<8x32xf32> to vector<8x32xbf16>
    %c0_48 = arith.constant 0 : index
    %c0_49 = arith.constant 0 : index
    %c0_50 = arith.constant 0 : index
    %145 = vector.load %arg7[%c0_48, %c0_49, %c0_50] : memref<1x32x32xbf16, #tpu.memory_space<vmem>>, vector<1x32x32xbf16>
    %146 = vector.shape_cast %145 : vector<1x32x32xbf16> to vector<32x32xbf16>
    %cst_51 = arith.constant dense<0.000000e+00> : vector<8x32xf32>
    %147 = tpu.matmul %144, %146, %cst_51 {dimension_numbers = #tpu.dot_dimension_numbers<[1], [0], [0], [1], [0, 0, 1, 1], [], []>} : vector<8x32xbf16>, vector<32x32xbf16>, vector<8x32xf32> -> vector<8x32xf32>
    %c0_52 = arith.constant 0 : index
    %c0_53 = arith.constant 0 : index
    %c0_54 = arith.constant 0 : index
    %148 = vector.load %arg8[%c0_52, %c0_53, %c0_54] : memref<1x1x32xf32, #tpu.memory_space<vmem>>, vector<1x1x32xf32>
    %149 = vector.shape_cast %148 : vector<1x1x32xf32> to vector<1x32xf32>
    %150 = vector.broadcast %149 : vector<1x32xf32> to vector<8x32xf32>
    %151 = arith.addf %147, %150 : vector<8x32xf32>
    %152 = arith.addf %9, %151 : vector<8x32xf32>
    %c0_55 = arith.constant 0 : index
    %c0_56 = arith.constant 0 : index
    %c0_57 = arith.constant 0 : index
    %153 = vector.load %arg9[%c0_55, %c0_56, %c0_57] : memref<1x1x32xf32, #tpu.memory_space<vmem>>, vector<1x1x32xf32>
    %154 = vector.shape_cast %153 : vector<1x1x32xf32> to vector<1x32xf32>
    %c0_58 = arith.constant 0 : index
    %c0_59 = arith.constant 0 : index
    %c0_60 = arith.constant 0 : index
    %155 = vector.load %arg10[%c0_58, %c0_59, %c0_60] : memref<1x1x32xf32, #tpu.memory_space<vmem>>, vector<1x1x32xf32>
    %156 = vector.shape_cast %155 : vector<1x1x32xf32> to vector<1x32xf32>
    %cst_61 = arith.constant dense<0.000000e+00> : vector<8xf32>
    %157 = vector.multi_reduction <add>, %152, %cst_61 [1] : vector<8x32xf32> to vector<8xf32>
    %158 = vector.shape_cast %157 : vector<8xf32> to vector<8x1xf32>
    %cst_62 = arith.constant 3.200000e+01 : f32
    %159 = vector.broadcast %cst_62 : f32 to vector<8x1xf32>
    %160 = arith.divf %158, %159 : vector<8x1xf32>
    %161 = vector.broadcast %160 : vector<8x1xf32> to vector<8x32xf32>
    %162 = arith.subf %152, %161 : vector<8x32xf32>
    %163 = arith.mulf %162, %162 : vector<8x32xf32>
    %cst_63 = arith.constant dense<0.000000e+00> : vector<8xf32>
    %164 = vector.multi_reduction <add>, %163, %cst_63 [1] : vector<8x32xf32> to vector<8xf32>
    %165 = vector.shape_cast %164 : vector<8xf32> to vector<8x1xf32>
    %cst_64 = arith.constant 3.200000e+01 : f32
    %166 = vector.broadcast %cst_64 : f32 to vector<8x1xf32>
    %167 = arith.divf %165, %166 : vector<8x1xf32>
    %168 = vector.broadcast %160 : vector<8x1xf32> to vector<8x32xf32>
    %169 = arith.subf %152, %168 : vector<8x32xf32>
    %cst_65 = arith.constant 9.99999974E-6 : f32
    %170 = vector.broadcast %cst_65 : f32 to vector<8x1xf32>
    %171 = arith.addf %167, %170 : vector<8x1xf32>
    %172 = math.rsqrt %171 : vector<8x1xf32>
    %173 = vector.broadcast %172 : vector<8x1xf32> to vector<8x32xf32>
    %174 = arith.mulf %169, %173 : vector<8x32xf32>
    %175 = vector.broadcast %154 : vector<1x32xf32> to vector<8x32xf32>
    %176 = arith.mulf %174, %175 : vector<8x32xf32>
    %177 = vector.broadcast %156 : vector<1x32xf32> to vector<8x32xf32>
    %178 = arith.addf %176, %177 : vector<8x32xf32>
    %179 = arith.truncf %178 : vector<8x32xf32> to vector<8x32xbf16>
    %c0_66 = arith.constant 0 : index
    %c0_67 = arith.constant 0 : index
    %c0_68 = arith.constant 0 : index
    %180 = vector.load %arg11[%c0_66, %c0_67, %c0_68] : memref<1x32x64xbf16, #tpu.memory_space<vmem>>, vector<1x32x64xbf16>
    %181 = vector.shape_cast %180 : vector<1x32x64xbf16> to vector<32x64xbf16>
    %cst_69 = arith.constant dense<0.000000e+00> : vector<8x64xf32>
    %182 = tpu.matmul %179, %181, %cst_69 {dimension_numbers = #tpu.dot_dimension_numbers<[1], [0], [0], [1], [0, 0, 1, 1], [], []>} : vector<8x32xbf16>, vector<32x64xbf16>, vector<8x64xf32> -> vector<8x64xf32>
    %c0_70 = arith.constant 0 : index
    %c0_71 = arith.constant 0 : index
    %c0_72 = arith.constant 0 : index
    %183 = vector.load %arg12[%c0_70, %c0_71, %c0_72] : memref<1x1x64xf32, #tpu.memory_space<vmem>>, vector<1x1x64xf32>
    %184 = vector.shape_cast %183 : vector<1x1x64xf32> to vector<1x64xf32>
    %185 = vector.broadcast %184 : vector<1x64xf32> to vector<8x64xf32>
    %186 = arith.addf %182, %185 : vector<8x64xf32>
    %187 = arith.mulf %186, %186 : vector<8x64xf32>
    %188 = arith.mulf %186, %187 : vector<8x64xf32>
    %cst_73 = arith.constant 4.471500e-02 : f32
    %189 = vector.broadcast %cst_73 : f32 to vector<8x64xf32>
    %190 = arith.mulf %189, %188 : vector<8x64xf32>
    %191 = arith.addf %186, %190 : vector<8x64xf32>
    %cst_74 = arith.constant 0.797884583 : f32
    %192 = vector.broadcast %cst_74 : f32 to vector<8x64xf32>
    %193 = arith.mulf %192, %191 : vector<8x64xf32>
    %194 = math.tanh %193 : vector<8x64xf32>
    %cst_75 = arith.constant 1.000000e+00 : f32
    %195 = vector.broadcast %cst_75 : f32 to vector<8x64xf32>
    %196 = arith.addf %195, %194 : vector<8x64xf32>
    %cst_76 = arith.constant 5.000000e-01 : f32
    %197 = vector.broadcast %cst_76 : f32 to vector<8x64xf32>
    %198 = arith.mulf %197, %196 : vector<8x64xf32>
    %199 = arith.mulf %186, %198 : vector<8x64xf32>
    %200 = arith.truncf %199 : vector<8x64xf32> to vector<8x64xbf16>
    %c0_77 = arith.constant 0 : index
    %c0_78 = arith.constant 0 : index
    %c0_79 = arith.constant 0 : index
    %201 = vector.load %arg13[%c0_77, %c0_78, %c0_79] : memref<1x64x32xbf16, #tpu.memory_space<vmem>>, vector<1x64x32xbf16>
    %202 = vector.shape_cast %201 : vector<1x64x32xbf16> to vector<64x32xbf16>
    %cst_80 = arith.constant dense<0.000000e+00> : vector<8x32xf32>
    %203 = tpu.matmul %200, %202, %cst_80 {dimension_numbers = #tpu.dot_dimension_numbers<[1], [0], [0], [1], [0, 0, 1, 1], [], []>} : vector<8x64xbf16>, vector<64x32xbf16>, vector<8x32xf32> -> vector<8x32xf32>
    %204 = arith.addf %152, %203 : vector<8x32xf32>
    %c0_81 = arith.constant 0 : index
    %c0_82 = arith.constant 0 : index
    %c0_83 = arith.constant 0 : index
    %205 = vector.load %arg14[%c0_81, %c0_82, %c0_83] : memref<1x1x32xf32, #tpu.memory_space<vmem>>, vector<1x1x32xf32>
    %206 = vector.shape_cast %205 : vector<1x1x32xf32> to vector<1x32xf32>
    %207 = vector.broadcast %206 : vector<1x32xf32> to vector<8x32xf32>
    %208 = arith.addf %204, %207 : vector<8x32xf32>
    %c0_84 = arith.constant 0 : index
    %c0_85 = arith.constant 0 : index
    %209 = vector.load %arg20[%c0_84, %c0_85] : memref<8x32xf32, #tpu.memory_space<vmem>>, vector<8x32xf32>
    tpu.vector_store %arg20[%c0_84, %c0_85], %208 {strides = array<i32>} : memref<8x32xf32, #tpu.memory_space<vmem>>, vector<8x32xf32>,
    %c1_i32 = arith.constant 1 : i32
    %210 = arith.cmpi eq, %arg1, %c1_i32 : i32
    %211 = arith.extui %210 : i1 to i32
    %c0_i32_86 = arith.constant 0 : i32
    %212 = arith.cmpi ne, %211, %c0_i32_86 : i32
    scf.if %212 {
      %c0_87 = arith.constant 0 : index
      %c0_88 = arith.constant 0 : index
      %213 = vector.load %arg20[%c0_87, %c0_88] : memref<8x32xf32, #tpu.memory_space<vmem>>, vector<8x32xf32>
      %c0_89 = arith.constant 0 : index
      %c0_90 = arith.constant 0 : index
      %214 = vector.load %arg15[%c0_89, %c0_90] : memref<1x32xf32, #tpu.memory_space<vmem>>, vector<1x32xf32>
      %c0_91 = arith.constant 0 : index
      %c0_92 = arith.constant 0 : index
      %215 = vector.load %arg16[%c0_91, %c0_92] : memref<1x32xf32, #tpu.memory_space<vmem>>, vector<1x32xf32>
      %cst_93 = arith.constant dense<0.000000e+00> : vector<8xf32>
      %216 = vector.multi_reduction <add>, %213, %cst_93 [1] : vector<8x32xf32> to vector<8xf32>
      %217 = vector.shape_cast %216 : vector<8xf32> to vector<8x1xf32>
      %cst_94 = arith.constant 3.200000e+01 : f32
      %218 = vector.broadcast %cst_94 : f32 to vector<8x1xf32>
      %219 = arith.divf %217, %218 : vector<8x1xf32>
      %220 = vector.broadcast %219 : vector<8x1xf32> to vector<8x32xf32>
      %221 = arith.subf %213, %220 : vector<8x32xf32>
      %222 = arith.mulf %221, %221 : vector<8x32xf32>
      %cst_95 = arith.constant dense<0.000000e+00> : vector<8xf32>
      %223 = vector.multi_reduction <add>, %222, %cst_95 [1] : vector<8x32xf32> to vector<8xf32>
      %224 = vector.shape_cast %223 : vector<8xf32> to vector<8x1xf32>
      %cst_96 = arith.constant 3.200000e+01 : f32
      %225 = vector.broadcast %cst_96 : f32 to vector<8x1xf32>
      %226 = arith.divf %224, %225 : vector<8x1xf32>
      %227 = vector.broadcast %219 : vector<8x1xf32> to vector<8x32xf32>
      %228 = arith.subf %213, %227 : vector<8x32xf32>
      %cst_97 = arith.constant 9.99999974E-6 : f32
      %229 = vector.broadcast %cst_97 : f32 to vector<8x1xf32>
      %230 = arith.addf %226, %229 : vector<8x1xf32>
      %231 = math.rsqrt %230 : vector<8x1xf32>
      %232 = vector.broadcast %231 : vector<8x1xf32> to vector<8x32xf32>
      %233 = arith.mulf %228, %232 : vector<8x32xf32>
      %234 = vector.broadcast %214 : vector<1x32xf32> to vector<8x32xf32>
      %235 = arith.mulf %233, %234 : vector<8x32xf32>
      %236 = vector.broadcast %215 : vector<1x32xf32> to vector<8x32xf32>
      %237 = arith.addf %235, %236 : vector<8x32xf32>
      %238 = arith.truncf %237 : vector<8x32xf32> to vector<8x32xbf16>
      %c0_98 = arith.constant 0 : index
      %c0_99 = arith.constant 0 : index
      %239 = vector.load %arg17[%c0_98, %c0_99] : memref<32x128xbf16, #tpu.memory_space<vmem>>, vector<32x128xbf16>
      %cst_100 = arith.constant dense<0.000000e+00> : vector<8x128xf32>
      %240 = tpu.matmul %238, %239, %cst_100 {dimension_numbers = #tpu.dot_dimension_numbers<[1], [0], [0], [1], [0, 0, 1, 1], [], []>} : vector<8x32xbf16>, vector<32x128xbf16>, vector<8x128xf32> -> vector<8x128xf32>
      %c0_101 = arith.constant 0 : index
      %c0_102 = arith.constant 0 : index
      %241 = vector.load %arg18[%c0_101, %c0_102] : memref<1x128xf32, #tpu.memory_space<vmem>>, vector<1x128xf32>
      %242 = vector.broadcast %241 : vector<1x128xf32> to vector<8x128xf32>
      %243 = arith.addf %240, %242 : vector<8x128xf32>
      %c0_103 = arith.constant 0 : index
      %c0_104 = arith.constant 0 : index
      %c0_105 = arith.constant 0 : index
      %244 = vector.load %arg19[%c0_103, %c0_104, %c0_105] : memref<1x8x128xf32, #tpu.memory_space<vmem>>, vector<1x8x128xf32>
      %245 = vector.shape_cast %244 : vector<1x8x128xf32> to vector<8x128xf32>
      %246 = vector.shape_cast %243 : vector<8x128xf32> to vector<1x8x128xf32>
      tpu.vector_store %arg19[%c0_103, %c0_104, %c0_105], %246 {strides = array<i32>} : memref<1x8x128xf32, #tpu.memory_space<vmem>>, vector<1x8x128xf32>,
    } else {
    }
    return
  }
  func.func @transform_0(%arg0: i32, %arg1: i32) -> (i32, i32, i32) {
    %c0_i32 = arith.constant 0 : i32
    %c0_i32_0 = arith.constant 0 : i32
    %c0_i32_1 = arith.constant 0 : i32
    return %arg0, %c0_i32, %c0_i32_0 : i32, i32, i32
  }
  func.func @transform_1(%arg0: i32, %arg1: i32) -> (i32, i32, i32) {
    %c0_i32 = arith.constant 0 : i32
    %c0_i32_0 = arith.constant 0 : i32
    %c0_i32_1 = arith.constant 0 : i32
    return %arg1, %c0_i32, %c0_i32_0 : i32, i32, i32
  }
  func.func @transform_2(%arg0: i32, %arg1: i32) -> (i32, i32, i32) {
    %c0_i32 = arith.constant 0 : i32
    %c0_i32_0 = arith.constant 0 : i32
    %c0_i32_1 = arith.constant 0 : i32
    return %arg1, %c0_i32, %c0_i32_0 : i32, i32, i32
  }
  func.func @transform_3(%arg0: i32, %arg1: i32) -> (i32, i32, i32) {
    %c0_i32 = arith.constant 0 : i32
    %c0_i32_0 = arith.constant 0 : i32
    %c0_i32_1 = arith.constant 0 : i32
    return %arg1, %c0_i32, %c0_i32_0 : i32, i32, i32
  }
  func.func @transform_4(%arg0: i32, %arg1: i32) -> (i32, i32, i32) {
    %c0_i32 = arith.constant 0 : i32
    %c0_i32_0 = arith.constant 0 : i32
    %c0_i32_1 = arith.constant 0 : i32
    return %arg1, %c0_i32, %c0_i32_0 : i32, i32, i32
  }
  func.func @transform_5(%arg0: i32, %arg1: i32) -> (i32, i32, i32) {
    %c0_i32 = arith.constant 0 : i32
    %c0_i32_0 = arith.constant 0 : i32
    %c0_i32_1 = arith.constant 0 : i32
    return %arg1, %c0_i32, %c0_i32_0 : i32, i32, i32
  }
  func.func @transform_6(%arg0: i32, %arg1: i32) -> (i32, i32, i32) {
    %c0_i32 = arith.constant 0 : i32
    %c0_i32_0 = arith.constant 0 : i32
    %c0_i32_1 = arith.constant 0 : i32
    return %arg1, %c0_i32, %c0_i32_0 : i32, i32, i32
  }
  func.func @transform_7(%arg0: i32, %arg1: i32) -> (i32, i32, i32) {
    %c0_i32 = arith.constant 0 : i32
    %c0_i32_0 = arith.constant 0 : i32
    %c0_i32_1 = arith.constant 0 : i32
    return %arg1, %c0_i32, %c0_i32_0 : i32, i32, i32
  }
  func.func @transform_8(%arg0: i32, %arg1: i32) -> (i32, i32, i32) {
    %c0_i32 = arith.constant 0 : i32
    %c0_i32_0 = arith.constant 0 : i32
    %c0_i32_1 = arith.constant 0 : i32
    return %arg1, %c0_i32, %c0_i32_0 : i32, i32, i32
  }
  func.func @transform_9(%arg0: i32, %arg1: i32) -> (i32, i32, i32) {
    %c0_i32 = arith.constant 0 : i32
    %c0_i32_0 = arith.constant 0 : i32
    %c0_i32_1 = arith.constant 0 : i32
    return %arg1, %c0_i32, %c0_i32_0 : i32, i32, i32
  }
  func.func @transform_10(%arg0: i32, %arg1: i32) -> (i32, i32, i32) {
    %c0_i32 = arith.constant 0 : i32
    %c0_i32_0 = arith.constant 0 : i32
    %c0_i32_1 = arith.constant 0 : i32
    return %arg1, %c0_i32, %c0_i32_0 : i32, i32, i32
  }
  func.func @transform_11(%arg0: i32, %arg1: i32) -> (i32, i32, i32) {
    %c0_i32 = arith.constant 0 : i32
    %c0_i32_0 = arith.constant 0 : i32
    %c0_i32_1 = arith.constant 0 : i32
    return %arg1, %c0_i32, %c0_i32_0 : i32, i32, i32
  }
  func.func @transform_12(%arg0: i32, %arg1: i32) -> (i32, i32, i32) {
    %c0_i32 = arith.constant 0 : i32
    %c0_i32_0 = arith.constant 0 : i32
    %c0_i32_1 = arith.constant 0 : i32
    return %arg1, %c0_i32, %c0_i32_0 : i32, i32, i32
  }
  func.func @transform_13(%arg0: i32, %arg1: i32) -> (i32, i32) {
    %c0_i32 = arith.constant 0 : i32
    %c0_i32_0 = arith.constant 0 : i32
    %c0_i32_1 = arith.constant 0 : i32
    return %c0_i32, %c0_i32_0 : i32, i32
  }
  func.func @transform_14(%arg0: i32, %arg1: i32) -> (i32, i32) {
    %c0_i32 = arith.constant 0 : i32
    %c0_i32_0 = arith.constant 0 : i32
    %c0_i32_1 = arith.constant 0 : i32
    return %c0_i32, %c0_i32_0 : i32, i32
  }
  func.func @transform_15(%arg0: i32, %arg1: i32) -> (i32, i32) {
    %c0_i32 = arith.constant 0 : i32
    %c0_i32_0 = arith.constant 0 : i32
    %c0_i32_1 = arith.constant 0 : i32
    return %c0_i32, %c0_i32_0 : i32, i32
  }
  func.func @transform_16(%arg0: i32, %arg1: i32) -> (i32, i32) {
    %c0_i32 = arith.constant 0 : i32
    %c0_i32_0 = arith.constant 0 : i32
    %c0_i32_1 = arith.constant 0 : i32
    return %c0_i32, %c0_i32_0 : i32, i32
  }
  func.func @transform_17(%arg0: i32, %arg1: i32) -> (i32, i32, i32) {
    %c0_i32 = arith.constant 0 : i32
    %c0_i32_0 = arith.constant 0 : i32
    %c0_i32_1 = arith.constant 0 : i32
    return %arg0, %c0_i32, %c0_i32_0 : i32, i32, i32
  }
}

</mosaic_0001>

<llo_original>
// kernel: zero_model_forward.1
$region0: #{zero_model_forward.1}
  #allocation0 [shape = 'u32[]', space=smem, size = 0x4, offset = 0x4, fixed_abs, tag = 'smem constant byte address 0x4 - core index']
  #allocation1 [shape = 'u32[144,128]{1,0:T(1,128)}', space=vmem, size = 0x12000, scoped, tag = 'internal scratch']
  #allocation2 [shape = 'f32[8,32]{1,0:T(8,128)}', space=vmem, size = 0x1000, scoped, tag = 'scratch operand']
  #allocation3 [shape = 'f32[8,32]{1,0:T(8,128)}', space=vmem, size = 0x1000, scoped, tag = 'scratch operand']
  %s0 = inlined_call_operand.vmem [shape: f32[2,8,32], index: 0, kind: input, shape index: {}]
  %s1 = inlined_call_operand.vmem [shape: f32[2,1,32], index: 1, kind: input, shape index: {}]
  %s2 = inlined_call_operand.vmem [shape: f32[2,1,32], index: 2, kind: input, shape index: {}]
  %s3 = inlined_call_operand.vmem [shape: bf16[2,32,96], index: 3, kind: input, shape index: {}]
  %s4 = inlined_call_operand.vmem [shape: f32[2,1,96], index: 4, kind: input, shape index: {}]
  %s5 = inlined_call_operand.vmem [shape: bf16[2,32,32], index: 5, kind: input, shape index: {}]
  %s6 = inlined_call_operand.vmem [shape: f32[2,1,32], index: 6, kind: input, shape index: {}]
  %s7 = inlined_call_operand.vmem [shape: f32[2,1,32], index: 7, kind: input, shape index: {}]
  %s8 = inlined_call_operand.vmem [shape: f32[2,1,32], index: 8, kind: input, shape index: {}]
  %s9 = inlined_call_operand.vmem [shape: bf16[2,32,64], index: 9, kind: input, shape index: {}]
  %s10 = inlined_call_operand.vmem [shape: f32[2,1,64], index: 10, kind: input, shape index: {}]
  %s11 = inlined_call_operand.vmem [shape: bf16[2,64,32], index: 11, kind: input, shape index: {}]
  %s12 = inlined_call_operand.vmem [shape: f32[2,1,32], index: 12, kind: input, shape index: {}]
  %s13 = inlined_call_operand.vmem [shape: f32[1,32], index: 13, kind: input, shape index: {}]
  %s14 = inlined_call_operand.vmem [shape: f32[1,32], index: 14, kind: input, shape index: {}]
  %s15 = inlined_call_operand.vmem [shape: bf16[32,128], index: 15, kind: input, shape index: {}]
  %s16 = inlined_call_operand.vmem [shape: f32[1,128], index: 16, kind: input, shape index: {}]
  %s17 = inlined_call_operand.hbm [shape: f32[2,8,128], index: 17, kind: output, shape index: {}]
  %s18 = sld [smem:[#allocation0]]
  $region109: #{zero_model_forward.1} parent=0
    _
  %s20 = ssub.s32 1, %s18
  %s21 = scalar_select 0, %s20, %s18
  $region1: #{zero_model_forward.1} parent=0
    #allocation4 [shape = 'u8[8192]{0}', space=vmem, size = 0x2000, scoped, tag = 'output window, operand 0']
    #allocation5 [shape = 's32[2]{0}', space=sflag, size = 0x8, scoped, tag = 'scoped memory for zero_model_forward.1']
    %22 = vsyncpa [#allocation5], 0
    %s23 = scalar_lea.sflag [#allocation5], 1
    %24 = vsyncpa %s23, 0
    loop: start=0, step=1, limit=6
    $region2: #{zero_model_forward.1} parent=1 // loop_pre_header
      _
    $region3: #{zero_model_forward.1} parent=1 // loop_header
      %s26 = sphi 0, %s30
      %p27 = scmp.ge.s32.totalorder %s26, 6
      %s33 = sphi 0, %s45
      %s34 = sphi 0, %s41
      %s35 = sphi 0, %s33
      %s36 = sphi 0, %s34
      %s37 = sphi 0, %s35
      %s38 = sphi 0, %s36
      %s48 = sphi 0, %s50
      %s51 = sphi 0, %s48
      %s52 = sphi 0, %s51
      %s68 = sphi 0, %s52
      %s74 = sphi 0, %s76
      %s77 = sphi 0, %s74
      %s78 = sphi 0, %s77
      %s94 = sphi 0, %s78
      %s100 = sphi 0, %s102
      %s103 = sphi 0, %s100
      %s104 = sphi 0, %s103
      %s120 = sphi 0, %s104
      %s126 = sphi 0, %s128
      %s129 = sphi 0, %s126
      %s130 = sphi 0, %s129
      %s146 = sphi 0, %s130
      %s152 = sphi 0, %s154
      %s155 = sphi 0, %s152
      %s156 = sphi 0, %s155
      %s172 = sphi 0, %s156
      %s178 = sphi 0, %s180
      %s181 = sphi 0, %s178
      %s182 = sphi 0, %s181
      %s198 = sphi 0, %s182
      %s204 = sphi 0, %s206
      %s207 = sphi 0, %s204
      %s208 = sphi 0, %s207
      %s224 = sphi 0, %s208
      %s230 = sphi 0, %s232
      %s233 = sphi 0, %s230
      %s234 = sphi 0, %s233
      %s250 = sphi 0, %s234
      %s256 = sphi 0, %s258
      %s259 = sphi 0, %s256
      %s260 = sphi 0, %s259
      %s276 = sphi 0, %s260
      %s282 = sphi 0, %s284
      %s285 = sphi 0, %s282
      %s286 = sphi 0, %s285
      %s302 = sphi 0, %s286
      %s308 = sphi 0, %s310
      %s311 = sphi 0, %s308
      %s312 = sphi 0, %s311
      %s328 = sphi 0, %s312
      %s334 = sphi 0, %s336
      %s337 = sphi 0, %s334
      %s338 = sphi 0, %s337
      %s354 = sphi 0, %s338
      %s360 = sphi 0, %s362
      %s363 = sphi 0, %s360
      %s364 = sphi 0, %s363
      %s380 = sphi 0, %s364
      %s384 = sphi 0, %s384
      %s386 = sphi 0, %s384
      %s387 = sphi 0, %s386
      %s401 = sphi 0, %s387
      %s405 = sphi 0, %s405
      %s407 = sphi 0, %s405
      %s408 = sphi 0, %s407
      %s422 = sphi 0, %s408
      %s426 = sphi 0, %s426
      %s428 = sphi 0, %s426
      %s429 = sphi 0, %s428
      %s443 = sphi 0, %s429
      %s447 = sphi 0, %s447
      %s449 = sphi 0, %s447
      %s450 = sphi 0, %s449
      %s464 = sphi 0, %s450
      %s470 = sphi 0, %s472
      %s473 = sphi 0, %s470
      %s474 = sphi 0, %s473
      %s490 = sphi 0, %s474
    $region4: #{zero_model_forward.1} parent=1 // loop_header_branch
      %29 = sbr.rel (%p27) target = $region8
    $region5: #{zero_model_forward.1} parent=1 // loop_body
      %s31 = ssub.s32 %s26, 1
      %s32 = ssub.s32 %s26, 2
      %s39 = sadd.s32 1, %s34
      %p40 = scmp.ge.s32.totalorder %s39, 2
      %s41 = scalar_select %p40, 0, %s39
      %s42 = sadd.s32 1, %s33
      %s43 = scalar_select %p40, %s42, %s33
      %p44 = scmp.ge.s32.totalorder %s43, 2
      %s45 = scalar_select %p44, 0, %s43
      %s46 = ssub.s32 %s33, %s45
      %p47 = scmp.eq.s32.totalorder %s46, 0
      %s49 = sadd.s32 %s48, 1
      %s50 = scalar_select %p47, %s48, %s49
      %p53 = pneg %p47
      %p54 = scmp.eq.s32.totalorder %s26, 3
      %p55 = por %p53, %p54
      %p56 = scmp.ne.s32.totalorder %s48, %s51
      %p57 = scmp.eq.s32.totalorder %s26, 0
      %p58 = por %p56, %p57
      %p59 = scmp.ne.s32.totalorder %s48, %s51
      %p60 = scmp.eq.s32.totalorder %s31, 3
      %p61 = por %p59, %p60
      %p62 = scmp.ne.s32.totalorder %s51, %s52
      %p63 = scmp.eq.s32.totalorder %s31, 0
      %p64 = por %p62, %p63
      %p65 = scmp.ne.s32.totalorder %s51, %s52
      %p66 = scmp.eq.s32.totalorder %s32, 3
      %p67 = por %p65, %p66
      %p69 = scmp.ne.s32.totalorder %s52, %s68
      %p70 = scmp.eq.s32.totalorder %s32, 0
      %p71 = por %p69, %p70
      %s72 = ssub.s32 %s34, %s41
      %p73 = scmp.eq.s32.totalorder %s72, 0
      %s75 = sadd.s32 %s74, 1
      %s76 = scalar_select %p73, %s74, %s75
      %p79 = pneg %p73
      %p80 = scmp.eq.s32.totalorder %s26, 3
      %p81 = por %p79, %p80
      %p82 = scmp.ne.s32.totalorder %s74, %s77
      %p83 = scmp.eq.s32.totalorder %s26, 0
      %p84 = por %p82, %p83
      %p85 = scmp.ne.s32.totalorder %s74, %s77
      %p86 = scmp.eq.s32.totalorder %s31, 3
      %p87 = por %p85, %p86
      %p88 = scmp.ne.s32.totalorder %s77, %s78
      %p89 = scmp.eq.s32.totalorder %s31, 0
      %p90 = por %p88, %p89
      %p91 = scmp.ne.s32.totalorder %s77, %s78
      %p92 = scmp.eq.s32.totalorder %s32, 3
      %p93 = por %p91, %p92
      %p95 = scmp.ne.s32.totalorder %s78, %s94
      %p96 = scmp.eq.s32.totalorder %s32, 0
      %p97 = por %p95, %p96
      %s98 = ssub.s32 %s34, %s41
      %p99 = scmp.eq.s32.totalorder %s98, 0
      %s101 = sadd.s32 %s100, 1
      %s102 = scalar_select %p99, %s100, %s101
      %p105 = pneg %p99
      %p106 = scmp.eq.s32.totalorder %s26, 3
      %p107 = por %p105, %p106
      %p108 = scmp.ne.s32.totalorder %s100, %s103
      %p109 = scmp.eq.s32.totalorder %s26, 0
      %p110 = por %p108, %p109
      %p111 = scmp.ne.s32.totalorder %s100, %s103
      %p112 = scmp.eq.s32.totalorder %s31, 3
      %p113 = por %p111, %p112
      %p114 = scmp.ne.s32.totalorder %s103, %s104
      %p115 = scmp.eq.s32.totalorder %s31, 0
      %p116 = por %p114, %p115
      %p117 = scmp.ne.s32.totalorder %s103, %s104
      %p118 = scmp.eq.s32.totalorder %s32, 3
      %p119 = por %p117, %p118
      %p121 = scmp.ne.s32.totalorder %s104, %s120
      %p122 = scmp.eq.s32.totalorder %s32, 0
      %p123 = por %p121, %p122
      %s124 = ssub.s32 %s34, %s41
      %p125 = scmp.eq.s32.totalorder %s124, 0
      %s127 = sadd.s32 %s126, 1
      %s128 = scalar_select %p125, %s126, %s127
      %p131 = pneg %p125
      %p132 = scmp.eq.s32.totalorder %s26, 3
      %p133 = por %p131, %p132
      %p134 = scmp.ne.s32.totalorder %s126, %s129
      %p135 = scmp.eq.s32.totalorder %s26, 0
      %p136 = por %p134, %p135
      %p137 = scmp.ne.s32.totalorder %s126, %s129
      %p138 = scmp.eq.s32.totalorder %s31, 3
      %p139 = por %p137, %p138
      %p140 = scmp.ne.s32.totalorder %s129, %s130
      %p141 = scmp.eq.s32.totalorder %s31, 0
      %p142 = por %p140, %p141
      %p143 = scmp.ne.s32.totalorder %s129, %s130
      %p144 = scmp.eq.s32.totalorder %s32, 3
      %p145 = por %p143, %p144
      %p147 = scmp.ne.s32.totalorder %s130, %s146
      %p148 = scmp.eq.s32.totalorder %s32, 0
      %p149 = por %p147, %p148
      %s150 = ssub.s32 %s34, %s41
      %p151 = scmp.eq.s32.totalorder %s150, 0
      %s153 = sadd.s32 %s152, 1
      %s154 = scalar_select %p151, %s152, %s153
      %p157 = pneg %p151
      %p158 = scmp.eq.s32.totalorder %s26, 3
      %p159 = por %p157, %p158
      %p160 = scmp.ne.s32.totalorder %s152, %s155
      %p161 = scmp.eq.s32.totalorder %s26, 0
      %p162 = por %p160, %p161
      %p163 = scmp.ne.s32.totalorder %s152, %s155
      %p164 = scmp.eq.s32.totalorder %s31, 3
      %p165 = por %p163, %p164
      %p166 = scmp.ne.s32.totalorder %s155, %s156
      %p167 = scmp.eq.s32.totalorder %s31, 0
      %p168 = por %p166, %p167
      %p169 = scmp.ne.s32.totalorder %s155, %s156
      %p170 = scmp.eq.s32.totalorder %s32, 3
      %p171 = por %p169, %p170
      %p173 = scmp.ne.s32.totalorder %s156, %s172
      %p174 = scmp.eq.s32.totalorder %s32, 0
      %p175 = por %p173, %p174
      %s176 = ssub.s32 %s34, %s41
      %p177 = scmp.eq.s32.totalorder %s176, 0
      %s179 = sadd.s32 %s178, 1
      %s180 = scalar_select %p177, %s178, %s179
      %p183 = pneg %p177
      %p184 = scmp.eq.s32.totalorder %s26, 3
      %p185 = por %p183, %p184
      %p186 = scmp.ne.s32.totalorder %s178, %s181
      %p187 = scmp.eq.s32.totalorder %s26, 0
      %p188 = por %p186, %p187
      %p189 = scmp.ne.s32.totalorder %s178, %s181
      %p190 = scmp.eq.s32.totalorder %s31, 3
      %p191 = por %p189, %p190
      %p192 = scmp.ne.s32.totalorder %s181, %s182
      %p193 = scmp.eq.s32.totalorder %s31, 0
      %p194 = por %p192, %p193
      %p195 = scmp.ne.s32.totalorder %s181, %s182
      %p196 = scmp.eq.s32.totalorder %s32, 3
      %p197 = por %p195, %p196
      %p199 = scmp.ne.s32.totalorder %s182, %s198
      %p200 = scmp.eq.s32.totalorder %s32, 0
      %p201 = por %p199, %p200
      %s202 = ssub.s32 %s34, %s41
      %p203 = scmp.eq.s32.totalorder %s202, 0
      %s205 = sadd.s32 %s204, 1
      %s206 = scalar_select %p203, %s204, %s205
      %p209 = pneg %p203
      %p210 = scmp.eq.s32.totalorder %s26, 3
      %p211 = por %p209, %p210
      %p212 = scmp.ne.s32.totalorder %s204, %s207
      %p213 = scmp.eq.s32.totalorder %s26, 0
      %p214 = por %p212, %p213
      %p215 = scmp.ne.s32.totalorder %s204, %s207
      %p216 = scmp.eq.s32.totalorder %s31, 3
      %p217 = por %p215, %p216
      %p218 = scmp.ne.s32.totalorder %s207, %s208
      %p219 = scmp.eq.s32.totalorder %s31, 0
      %p220 = por %p218, %p219
      %p221 = scmp.ne.s32.totalorder %s207, %s208
      %p222 = scmp.eq.s32.totalorder %s32, 3
      %p223 = por %p221, %p222
      %p225 = scmp.ne.s32.totalorder %s208, %s224
      %p226 = scmp.eq.s32.totalorder %s32, 0
      %p227 = por %p225, %p226
      %s228 = ssub.s32 %s34, %s41
      %p229 = scmp.eq.s32.totalorder %s228, 0
      %s231 = sadd.s32 %s230, 1
      %s232 = scalar_select %p229, %s230, %s231
      %p235 = pneg %p229
      %p236 = scmp.eq.s32.totalorder %s26, 3
      %p237 = por %p235, %p236
      %p238 = scmp.ne.s32.totalorder %s230, %s233
      %p239 = scmp.eq.s32.totalorder %s26, 0
      %p240 = por %p238, %p239
      %p241 = scmp.ne.s32.totalorder %s230, %s233
      %p242 = scmp.eq.s32.totalorder %s31, 3
      %p243 = por %p241, %p242
      %p244 = scmp.ne.s32.totalorder %s233, %s234
      %p245 = scmp.eq.s32.totalorder %s31, 0
      %p246 = por %p244, %p245
      %p247 = scmp.ne.s32.totalorder %s233, %s234
      %p248 = scmp.eq.s32.totalorder %s32, 3
      %p249 = por %p247, %p248
      %p251 = scmp.ne.s32.totalorder %s234, %s250
      %p252 = scmp.eq.s32.totalorder %s32, 0
      %p253 = por %p251, %p252
      %s254 = ssub.s32 %s34, %s41
      %p255 = scmp.eq.s32.totalorder %s254, 0
      %s257 = sadd.s32 %s256, 1
      %s258 = scalar_select %p255, %s256, %s257
      %p261 = pneg %p255
      %p262 = scmp.eq.s32.totalorder %s26, 3
      %p263 = por %p261, %p262
      %p264 = scmp.ne.s32.totalorder %s256, %s259
      %p265 = scmp.eq.s32.totalorder %s26, 0
      %p266 = por %p264, %p265
      %p267 = scmp.ne.s32.totalorder %s256, %s259
      %p268 = scmp.eq.s32.totalorder %s31, 3
      %p269 = por %p267, %p268
      %p270 = scmp.ne.s32.totalorder %s259, %s260
      %p271 = scmp.eq.s32.totalorder %s31, 0
      %p272 = por %p270, %p271
      %p273 = scmp.ne.s32.totalorder %s259, %s260
      %p274 = scmp.eq.s32.totalorder %s32, 3
      %p275 = por %p273, %p274
      %p277 = scmp.ne.s32.totalorder %s260, %s276
      %p278 = scmp.eq.s32.totalorder %s32, 0
      %p279 = por %p277, %p278
      %s280 = ssub.s32 %s34, %s41
      %p281 = scmp.eq.s32.totalorder %s280, 0
      %s283 = sadd.s32 %s282, 1
      %s284 = scalar_select %p281, %s282, %s283
      %p287 = pneg %p281
      %p288 = scmp.eq.s32.totalorder %s26, 3
      %p289 = por %p287, %p288
      %p290 = scmp.ne.s32.totalorder %s282, %s285
      %p291 = scmp.eq.s32.totalorder %s26, 0
      %p292 = por %p290, %p291
      %p293 = scmp.ne.s32.totalorder %s282, %s285
      %p294 = scmp.eq.s32.totalorder %s31, 3
      %p295 = por %p293, %p294
      %p296 = scmp.ne.s32.totalorder %s285, %s286
      %p297 = scmp.eq.s32.totalorder %s31, 0
      %p298 = por %p296, %p297
      %p299 = scmp.ne.s32.totalorder %s285, %s286
      %p300 = scmp.eq.s32.totalorder %s32, 3
      %p301 = por %p299, %p300
      %p303 = scmp.ne.s32.totalorder %s286, %s302
      %p304 = scmp.eq.s32.totalorder %s32, 0
      %p305 = por %p303, %p304
      %s306 = ssub.s32 %s34, %s41
      %p307 = scmp.eq.s32.totalorder %s306, 0
      %s309 = sadd.s32 %s308, 1
      %s310 = scalar_select %p307, %s308, %s309
      %p313 = pneg %p307
      %p314 = scmp.eq.s32.totalorder %s26, 3
      %p315 = por %p313, %p314
      %p316 = scmp.ne.s32.totalorder %s308, %s311
      %p317 = scmp.eq.s32.totalorder %s26, 0
      %p318 = por %p316, %p317
      %p319 = scmp.ne.s32.totalorder %s308, %s311
      %p320 = scmp.eq.s32.totalorder %s31, 3
      %p321 = por %p319, %p320
      %p322 = scmp.ne.s32.totalorder %s311, %s312
      %p323 = scmp.eq.s32.totalorder %s31, 0
      %p324 = por %p322, %p323
      %p325 = scmp.ne.s32.totalorder %s311, %s312
      %p326 = scmp.eq.s32.totalorder %s32, 3
      %p327 = por %p325, %p326
      %p329 = scmp.ne.s32.totalorder %s312, %s328
      %p330 = scmp.eq.s32.totalorder %s32, 0
      %p331 = por %p329, %p330
      %s332 = ssub.s32 %s34, %s41
      %p333 = scmp.eq.s32.totalorder %s332, 0
      %s335 = sadd.s32 %s334, 1
      %s336 = scalar_select %p333, %s334, %s335
      %p339 = pneg %p333
      %p340 = scmp.eq.s32.totalorder %s26, 3
      %p341 = por %p339, %p340
      %p342 = scmp.ne.s32.totalorder %s334, %s337
      %p343 = scmp.eq.s32.totalorder %s26, 0
      %p344 = por %p342, %p343
      %p345 = scmp.ne.s32.totalorder %s334, %s337
      %p346 = scmp.eq.s32.totalorder %s31, 3
      %p347 = por %p345, %p346
      %p348 = scmp.ne.s32.totalorder %s337, %s338
      %p349 = scmp.eq.s32.totalorder %s31, 0
      %p350 = por %p348, %p349
      %p351 = scmp.ne.s32.totalorder %s337, %s338
      %p352 = scmp.eq.s32.totalorder %s32, 3
      %p353 = por %p351, %p352
      %p355 = scmp.ne.s32.totalorder %s338, %s354
      %p356 = scmp.eq.s32.totalorder %s32, 0
      %p357 = por %p355, %p356
      %s358 = ssub.s32 %s34, %s41
      %p359 = scmp.eq.s32.totalorder %s358, 0
      %s361 = sadd.s32 %s360, 1
      %s362 = scalar_select %p359, %s360, %s361
      %p365 = pneg %p359
      %p366 = scmp.eq.s32.totalorder %s26, 3
      %p367 = por %p365, %p366
      %p368 = scmp.ne.s32.totalorder %s360, %s363
      %p369 = scmp.eq.s32.totalorder %s26, 0
      %p370 = por %p368, %p369
      %p371 = scmp.ne.s32.totalorder %s360, %s363
      %p372 = scmp.eq.s32.totalorder %s31, 3
      %p373 = por %p371, %p372
      %p374 = scmp.ne.s32.totalorder %s363, %s364
      %p375 = scmp.eq.s32.totalorder %s31, 0
      %p376 = por %p374, %p375
      %p377 = scmp.ne.s32.totalorder %s363, %s364
      %p378 = scmp.eq.s32.totalorder %s32, 3
      %p379 = por %p377, %p378
      %p381 = scmp.ne.s32.totalorder %s364, %s380
      %p382 = scmp.eq.s32.totalorder %s32, 0
      %p383 = por %p381, %p382
      %s385 = sadd.s32 %s384, 1
      %p388 = scmp.eq.s32.totalorder %s26, 3
      %p389 = scmp.ne.s32.totalorder %s384, %s386
      %p390 = scmp.eq.s32.totalorder %s26, 0
      %p391 = por %p389, %p390
      %p392 = scmp.ne.s32.totalorder %s384, %s386
      %p393 = scmp.eq.s32.totalorder %s31, 3
      %p394 = por %p392, %p393
      %p395 = scmp.ne.s32.totalorder %s386, %s387
      %p396 = scmp.eq.s32.totalorder %s31, 0
      %p397 = por %p395, %p396
      %p398 = scmp.ne.s32.totalorder %s386, %s387
      %p399 = scmp.eq.s32.totalorder %s32, 3
      %p400 = por %p398, %p399
      %p402 = scmp.ne.s32.totalorder %s387, %s401
      %p403 = scmp.eq.s32.totalorder %s32, 0
      %p404 = por %p402, %p403
      %s406 = sadd.s32 %s405, 1
      %p409 = scmp.eq.s32.totalorder %s26, 3
      %p410 = scmp.ne.s32.totalorder %s405, %s407
      %p411 = scmp.eq.s32.totalorder %s26, 0
      %p412 = por %p410, %p411
      %p413 = scmp.ne.s32.totalorder %s405, %s407
      %p414 = scmp.eq.s32.totalorder %s31, 3
      %p415 = por %p413, %p414
      %p416 = scmp.ne.s32.totalorder %s407, %s408
      %p417 = scmp.eq.s32.totalorder %s31, 0
      %p418 = por %p416, %p417
      %p419 = scmp.ne.s32.totalorder %s407, %s408
      %p420 = scmp.eq.s32.totalorder %s32, 3
      %p421 = por %p419, %p420
      %p423 = scmp.ne.s32.totalorder %s408, %s422
      %p424 = scmp.eq.s32.totalorder %s32, 0
      %p425 = por %p423, %p424
      %s427 = sadd.s32 %s426, 1
      %p430 = scmp.eq.s32.totalorder %s26, 3
      %p431 = scmp.ne.s32.totalorder %s426, %s428
      %p432 = scmp.eq.s32.totalorder %s26, 0
      %p433 = por %p431, %p432
      %p434 = scmp.ne.s32.totalorder %s426, %s428
      %p435 = scmp.eq.s32.totalorder %s31, 3
      %p436 = por %p434, %p435
      %p437 = scmp.ne.s32.totalorder %s428, %s429
      %p438 = scmp.eq.s32.totalorder %s31, 0
      %p439 = por %p437, %p438
      %p440 = scmp.ne.s32.totalorder %s428, %s429
      %p441 = scmp.eq.s32.totalorder %s32, 3
      %p442 = por %p440, %p441
      %p444 = scmp.ne.s32.totalorder %s429, %s443
      %p445 = scmp.eq.s32.totalorder %s32, 0
      %p446 = por %p444, %p445
      %s448 = sadd.s32 %s447, 1
      %p451 = scmp.eq.s32.totalorder %s26, 3
      %p452 = scmp.ne.s32.totalorder %s447, %s449
      %p453 = scmp.eq.s32.totalorder %s26, 0
      %p454 = por %p452, %p453
      %p455 = scmp.ne.s32.totalorder %s447, %s449
      %p456 = scmp.eq.s32.totalorder %s31, 3
      %p457 = por %p455, %p456
      %p458 = scmp.ne.s32.totalorder %s449, %s450
      %p459 = scmp.eq.s32.totalorder %s31, 0
      %p460 = por %p458, %p459
      %p461 = scmp.ne.s32.totalorder %s449, %s450
      %p462 = scmp.eq.s32.totalorder %s32, 3
      %p463 = por %p461, %p462
      %p465 = scmp.ne.s32.totalorder %s450, %s464
      %p466 = scmp.eq.s32.totalorder %s32, 0
      %p467 = por %p465, %p466
      %s468 = ssub.s32 %s33, %s45
      %p469 = scmp.eq.s32.totalorder %s468, 0
      %s471 = sadd.s32 %s470, 1
      %s472 = scalar_select %p469, %s470, %s471
      %p475 = pneg %p469
      %p476 = scmp.eq.s32.totalorder %s26, 3
      %p477 = por %p475, %p476
      %p478 = scmp.ne.s32.totalorder %s470, %s473
      %p479 = scmp.eq.s32.totalorder %s26, 0
      %p480 = por %p478, %p479
      %p481 = scmp.ne.s32.totalorder %s470, %s473
      %p482 = scmp.eq.s32.totalorder %s31, 3
      %p483 = por %p481, %p482
      %p484 = scmp.ne.s32.totalorder %s473, %s474
      %p485 = scmp.eq.s32.totalorder %s31, 0
      %p486 = por %p484, %p485
      %p487 = scmp.ne.s32.totalorder %s473, %s474
      %p488 = scmp.eq.s32.totalorder %s32, 3
      %p489 = por %p487, %p488
      %p491 = scmp.ne.s32.totalorder %s474, %s490
      %p492 = scmp.eq.s32.totalorder %s32, 0
      %p493 = por %p491, %p492
      %p494 = scmp.le.s32.totalorder 1, %s26
      %p495 = scmp.lt.s32.totalorder %s26, 5
      %p496 = pnand %p494, %p495
      %p497 = pneg %p496
      // Predicated region
      $region9: #{zero_model_forward.1} parent=5 // pred_check
        _
      $region10: #{zero_model_forward.1} parent=5 // pred_check_branch
        %499 = sbr.rel (%p496) target = $region12
      $region11: #{zero_model_forward.1} parent=5 // pred_region
        %s500 = ssub.s32 %s26, 1
        // Predicated region
        $region13: #{zero_model_forward.1} parent=11 // pred_check
          %p501 = pneg %p397
        $region14: #{zero_model_forward.1} parent=11 // pred_check_branch
          %503 = sbr.rel (%p501) target = $region16
        $region15: #{zero_model_forward.1} parent=11 // pred_region
          _
        $region16: #{zero_model_forward.1} parent=11 // pred_fallthru
          _
        // Predicated region
        $region17: #{zero_model_forward.1} parent=11 // pred_check
          %p504 = pneg %p418
        $region18: #{zero_model_forward.1} parent=11 // pred_check_branch
          %506 = sbr.rel (%p504) target = $region20
        $region19: #{zero_model_forward.1} parent=11 // pred_region
          _
        $region20: #{zero_model_forward.1} parent=11 // pred_fallthru
          _
        // Predicated region
        $region21: #{zero_model_forward.1} parent=11 // pred_check
          %p507 = pneg %p439
        $region22: #{zero_model_forward.1} parent=11 // pred_check_branch
          %509 = sbr.rel (%p507) target = $region24
        $region23: #{zero_model_forward.1} parent=11 // pred_region
          _
        $region24: #{zero_model_forward.1} parent=11 // pred_fallthru
          _
        // Predicated region
        $region25: #{zero_model_forward.1} parent=11 // pred_check
          %p510 = pneg %p460
        $region26: #{zero_model_forward.1} parent=11 // pred_check_branch
          %512 = sbr.rel (%p510) target = $region28
        $region27: #{zero_model_forward.1} parent=11 // pred_region
          _
        $region28: #{zero_model_forward.1} parent=11 // pred_fallthru
          _
      $region12: #{zero_model_forward.1} parent=5 // pred_fallthru
        _
      %p513 = scmp.lt.s32.totalorder %s26, 4
      // Predicated region
      $region29: #{zero_model_forward.1} parent=5 // pred_check
        %p514 = pneg %p513
      $region30: #{zero_model_forward.1} parent=5 // pred_check_branch
        %516 = sbr.rel (%p514) target = $region32
      $region31: #{zero_model_forward.1} parent=5 // pred_region
        // Predicated region
        $region33: #{zero_model_forward.1} parent=31 // pred_check
          %p517 = pneg %p58
        $region34: #{zero_model_forward.1} parent=31 // pred_check_branch
          %519 = sbr.rel (%p517) target = $region36
        $region35: #{zero_model_forward.1} parent=31 // pred_region
          %p520 = scmp.lt.s32.totalorder %s33, 1
          %s521 = scalar_select %p520, %s33, 1
          %s522 = smul.addr %s521, 8
          %s523 = scalar_lea.vmem %s0, %s522
        $region36: #{zero_model_forward.1} parent=31 // pred_fallthru
          _
        // Predicated region
        $region37: #{zero_model_forward.1} parent=31 // pred_check
          %p524 = pneg %p84
        $region38: #{zero_model_forward.1} parent=31 // pred_check_branch
          %526 = sbr.rel (%p524) target = $region40
        $region39: #{zero_model_forward.1} parent=31 // pred_region
          %p527 = scmp.lt.s32.totalorder %s34, 1
          %s528 = scalar_select %p527, %s34, 1
          %s529 = scalar_lea.vmem %s1, %s528
        $region40: #{zero_model_forward.1} parent=31 // pred_fallthru
          _
        // Predicated region
        $region41: #{zero_model_forward.1} parent=31 // pred_check
          %p530 = pneg %p110
        $region42: #{zero_model_forward.1} parent=31 // pred_check_branch
          %532 = sbr.rel (%p530) target = $region44
        $region43: #{zero_model_forward.1} parent=31 // pred_region
          %p533 = scmp.lt.s32.totalorder %s34, 1
          %s534 = scalar_select %p533, %s34, 1
          %s535 = scalar_lea.vmem %s2, %s534
        $region44: #{zero_model_forward.1} parent=31 // pred_fallthru
          _
        // Predicated region
        $region45: #{zero_model_forward.1} parent=31 // pred_check
          %p536 = pneg %p136
        $region46: #{zero_model_forward.1} parent=31 // pred_check_branch
          %538 = sbr.rel (%p536) target = $region48
        $region47: #{zero_model_forward.1} parent=31 // pred_region
          %p539 = scmp.lt.s32.totalorder %s34, 1
          %s540 = scalar_select %p539, %s34, 1
          %s541 = smul.addr %s540, 4
          %s542 = smul.addr %s541, 4
          %s543 = scalar_lea.vmem %s3, %s542
        $region48: #{zero_model_forward.1} parent=31 // pred_fallthru
          _
        // Predicated region
        $region49: #{zero_model_forward.1} parent=31 // pred_check
          %p544 = pneg %p162
        $region50: #{zero_model_forward.1} parent=31 // pred_check_branch
          %546 = sbr.rel (%p544) target = $region52
        $region51: #{zero_model_forward.1} parent=31 // pred_region
          %p547 = scmp.lt.s32.totalorder %s34, 1
          %s548 = scalar_select %p547, %s34, 1
          %s549 = scalar_lea.vmem %s4, %s548
        $region52: #{zero_model_forward.1} parent=31 // pred_fallthru
          _
        // Predicated region
        $region53: #{zero_model_forward.1} parent=31 // pred_check
          %p550 = pneg %p188
        $region54: #{zero_model_forward.1} parent=31 // pred_check_branch
          %552 = sbr.rel (%p550) target = $region56
        $region55: #{zero_model_forward.1} parent=31 // pred_region
          %p553 = scmp.lt.s32.totalorder %s34, 1
          %s554 = scalar_select %p553, %s34, 1
          %s555 = smul.addr %s554, 4
          %s556 = smul.addr %s555, 4
          %s557 = scalar_lea.vmem %s5, %s556
        $region56: #{zero_model_forward.1} parent=31 // pred_fallthru
          _
        // Predicated region
        $region57: #{zero_model_forward.1} parent=31 // pred_check
          %p558 = pneg %p214
        $region58: #{zero_model_forward.1} parent=31 // pred_check_branch
          %560 = sbr.rel (%p558) target = $region60
        $region59: #{zero_model_forward.1} parent=31 // pred_region
          %p561 = scmp.lt.s32.totalorder %s34, 1
          %s562 = scalar_select %p561, %s34, 1
          %s563 = scalar_lea.vmem %s6, %s562
        $region60: #{zero_model_forward.1} parent=31 // pred_fallthru
          _
        // Predicated region
        $region61: #{zero_model_forward.1} parent=31 // pred_check
          %p564 = pneg %p240
        $region62: #{zero_model_forward.1} parent=31 // pred_check_branch
          %566 = sbr.rel (%p564) target = $region64
        $region63: #{zero_model_forward.1} parent=31 // pred_region
          %p567 = scmp.lt.s32.totalorder %s34, 1
          %s568 = scalar_select %p567, %s34, 1
          %s569 = scalar_lea.vmem %s7, %s568
        $region64: #{zero_model_forward.1} parent=31 // pred_fallthru
          _
        // Predicated region
        $region65: #{zero_model_forward.1} parent=31 // pred_check
          %p570 = pneg %p266
        $region66: #{zero_model_forward.1} parent=31 // pred_check_branch
          %572 = sbr.rel (%p570) target = $region68
        $region67: #{zero_model_forward.1} parent=31 // pred_region
          %p573 = scmp.lt.s32.totalorder %s34, 1
          %s574 = scalar_select %p573, %s34, 1
          %s575 = scalar_lea.vmem %s8, %s574
        $region68: #{zero_model_forward.1} parent=31 // pred_fallthru
          _
        // Predicated region
        $region69: #{zero_model_forward.1} parent=31 // pred_check
          %p576 = pneg %p292
        $region70: #{zero_model_forward.1} parent=31 // pred_check_branch
          %578 = sbr.rel (%p576) target = $region72
        $region71: #{zero_model_forward.1} parent=31 // pred_region
          %p579 = scmp.lt.s32.totalorder %s34, 1
          %s580 = scalar_select %p579, %s34, 1
          %s581 = smul.addr %s580, 4
          %s582 = smul.addr %s581, 4
          %s583 = scalar_lea.vmem %s9, %s582
        $region72: #{zero_model_forward.1} parent=31 // pred_fallthru
          _
        // Predicated region
        $region73: #{zero_model_forward.1} parent=31 // pred_check
          %p584 = pneg %p318
        $region74: #{zero_model_forward.1} parent=31 // pred_check_branch
          %586 = sbr.rel (%p584) target = $region76
        $region75: #{zero_model_forward.1} parent=31 // pred_region
          %p587 = scmp.lt.s32.totalorder %s34, 1
          %s588 = scalar_select %p587, %s34, 1
          %s589 = scalar_lea.vmem %s10, %s588
        $region76: #{zero_model_forward.1} parent=31 // pred_fallthru
          _
        // Predicated region
        $region77: #{zero_model_forward.1} parent=31 // pred_check
          %p590 = pneg %p344
        $region78: #{zero_model_forward.1} parent=31 // pred_check_branch
          %592 = sbr.rel (%p590) target = $region80
        $region79: #{zero_model_forward.1} parent=31 // pred_region
          %p593 = scmp.lt.s32.totalorder %s34, 1
          %s594 = scalar_select %p593, %s34, 1
          %s595 = smul.addr %s594, 8
          %s596 = smul.addr %s595, 4
          %s597 = scalar_lea.vmem %s11, %s596
        $region80: #{zero_model_forward.1} parent=31 // pred_fallthru
          _
        // Predicated region
        $region81: #{zero_model_forward.1} parent=31 // pred_check
          %p598 = pneg %p370
        $region82: #{zero_model_forward.1} parent=31 // pred_check_branch
          %600 = sbr.rel (%p598) target = $region84
        $region83: #{zero_model_forward.1} parent=31 // pred_region
          %p601 = scmp.lt.s32.totalorder %s34, 1
          %s602 = scalar_select %p601, %s34, 1
          %s603 = scalar_lea.vmem %s12, %s602
        $region84: #{zero_model_forward.1} parent=31 // pred_fallthru
          _
      $region32: #{zero_model_forward.1} parent=5 // pred_fallthru
        _
      %p604 = scmp.le.s32.totalorder 1, %s26
      %p605 = scmp.lt.s32.totalorder %s26, 5
      %p606 = pnand %p604, %p605
      %p607 = pneg %p606
      // Predicated region
      $region85: #{zero_model_forward.1} parent=5 // pred_check
        _
      $region86: #{zero_model_forward.1} parent=5 // pred_check_branch
        %609 = sbr.rel (%p606) target = $region88
      $region87: #{zero_model_forward.1} parent=5 // pred_region
        %s610 = ssub.s32 %s26, 1
        %p611 = scmp.lt.s32.totalorder %s35, 1
        %s612 = scalar_select %p611, %s35, 1
        %s613 = smul.addr %s612, 8
        %s614 = scalar_lea.vmem %s0, %s613
        %p615 = pneg %p64
        %p616 = pneg %p61
        %p617 = scmp.lt.s32.totalorder %s36, 1
        %s618 = scalar_select %p617, %s36, 1
        %s619 = scalar_lea.vmem %s1, %s618
        %p620 = pneg %p90
        %p621 = pneg %p87
        %p622 = scmp.lt.s32.totalorder %s36, 1
        %s623 = scalar_select %p622, %s36, 1
        %s624 = scalar_lea.vmem %s2, %s623
        %p625 = pneg %p116
        %p626 = pneg %p113
        %p627 = scmp.lt.s32.totalorder %s36, 1
        %s628 = scalar_select %p627, %s36, 1
        %s629 = smul.addr %s628, 4
        %s630 = smul.addr %s629, 4
        %s631 = scalar_lea.vmem %s3, %s630
        %p632 = pneg %p142
        %p633 = pneg %p139
        %p634 = scmp.lt.s32.totalorder %s36, 1
        %s635 = scalar_select %p634, %s36, 1
        %s636 = scalar_lea.vmem %s4, %s635
        %p637 = pneg %p168
        %p638 = pneg %p165
        %p639 = scmp.lt.s32.totalorder %s36, 1
        %s640 = scalar_select %p639, %s36, 1
        %s641 = smul.addr %s640, 4
        %s642 = smul.addr %s641, 4
        %s643 = scalar_lea.vmem %s5, %s642
        %p644 = pneg %p194
        %p645 = pneg %p191
        %p646 = scmp.lt.s32.totalorder %s36, 1
        %s647 = scalar_select %p646, %s36, 1
        %s648 = scalar_lea.vmem %s6, %s647
        %p649 = pneg %p220
        %p650 = pneg %p217
        %p651 = scmp.lt.s32.totalorder %s36, 1
        %s652 = scalar_select %p651, %s36, 1
        %s653 = scalar_lea.vmem %s7, %s652
        %p654 = pneg %p246
        %p655 = pneg %p243
        %p656 = scmp.lt.s32.totalorder %s36, 1
        %s657 = scalar_select %p656, %s36, 1
        %s658 = scalar_lea.vmem %s8, %s657
        %p659 = pneg %p272
        %p660 = pneg %p269
        %p661 = scmp.lt.s32.totalorder %s36, 1
        %s662 = scalar_select %p661, %s36, 1
        %s663 = smul.addr %s662, 4
        %s664 = smul.addr %s663, 4
        %s665 = scalar_lea.vmem %s9, %s664
        %p666 = pneg %p298
        %p667 = pneg %p295
        %p668 = scmp.lt.s32.totalorder %s36, 1
        %s669 = scalar_select %p668, %s36, 1
        %s670 = scalar_lea.vmem %s10, %s669
        %p671 = pneg %p324
        %p672 = pneg %p321
        %p673 = scmp.lt.s32.totalorder %s36, 1
        %s674 = scalar_select %p673, %s36, 1
        %s675 = smul.addr %s674, 8
        %s676 = smul.addr %s675, 4
        %s677 = scalar_lea.vmem %s11, %s676
        %p678 = pneg %p350
        %p679 = pneg %p347
        %p680 = scmp.lt.s32.totalorder %s36, 1
        %s681 = scalar_select %p680, %s36, 1
        %s682 = scalar_lea.vmem %s12, %s681
        %p683 = pneg %p376
        %p684 = pneg %p373
        %p685 = pneg %p397
        %p686 = pneg %p394
        %p687 = pneg %p418
        %p688 = pneg %p415
        %p689 = pneg %p439
        %p690 = pneg %p436
        %p691 = pneg %p460
        %p692 = pneg %p457
        %p693 = pneg %p486
        %p694 = pneg %p483
        %s695 = sand.u32 %s473, 1
        %s696 = scalar_lea.sflag [#allocation5], %s695
        %s697 = sand.u32 %s473, 1
        %s698 = smul.addr %s697, 8
        %s699 = scalar_lea.vmem [#allocation4], %s698
        %p700 = scmp.lt.s32.totalorder %s35, 1
        %s701 = scalar_select %p700, %s35, 1
        %s702 = smul.addr %s701, 8
        %s703 = scalar_lea.vmem %s0, %s702
        %p704 = scmp.lt.s32.totalorder %s36, 1
        %s705 = scalar_select %p704, %s36, 1
        %s706 = scalar_lea.vmem %s1, %s705
        %p707 = scmp.lt.s32.totalorder %s36, 1
        %s708 = scalar_select %p707, %s36, 1
        %s709 = scalar_lea.vmem %s2, %s708
        %p710 = scmp.lt.s32.totalorder %s36, 1
        %s711 = scalar_select %p710, %s36, 1
        %s712 = smul.addr %s711, 4
        %s713 = smul.addr %s712, 4
        %s714 = scalar_lea.vmem %s3, %s713
        %p715 = scmp.lt.s32.totalorder %s36, 1
        %s716 = scalar_select %p715, %s36, 1
        %s717 = scalar_lea.vmem %s4, %s716
        %p718 = scmp.lt.s32.totalorder %s36, 1
        %s719 = scalar_select %p718, %s36, 1
        %s720 = smul.addr %s719, 4
        %s721 = smul.addr %s720, 4
        %s722 = scalar_lea.vmem %s5, %s721
        %p723 = scmp.lt.s32.totalorder %s36, 1
        %s724 = scalar_select %p723, %s36, 1
        %s725 = scalar_lea.vmem %s6, %s724
        %p726 = scmp.lt.s32.totalorder %s36, 1
        %s727 = scalar_select %p726, %s36, 1
        %s728 = scalar_lea.vmem %s7, %s727
        %p729 = scmp.lt.s32.totalorder %s36, 1
        %s730 = scalar_select %p729, %s36, 1
        %s731 = scalar_lea.vmem %s8, %s730
        %p732 = scmp.lt.s32.totalorder %s36, 1
        %s733 = scalar_select %p732, %s36, 1
        %s734 = smul.addr %s733, 4
        %s735 = smul.addr %s734, 4
        %s736 = scalar_lea.vmem %s9, %s735
        %p737 = scmp.lt.s32.totalorder %s36, 1
        %s738 = scalar_select %p737, %s36, 1
        %s739 = scalar_lea.vmem %s10, %s738
        %p740 = scmp.lt.s32.totalorder %s36, 1
        %s741 = scalar_select %p740, %s36, 1
        %s742 = smul.addr %s741, 8
        %s743 = smul.addr %s742, 4
        %s744 = scalar_lea.vmem %s11, %s743
        %p745 = scmp.lt.s32.totalorder %s36, 1
        %s746 = scalar_select %p745, %s36, 1
        %s747 = scalar_lea.vmem %s12, %s746
        %p749 = scmp.eq.s32.totalorder %s36, 0
        // Predicated region
        $region89: #{zero_model_forward.1} parent=87 // pred_check
          %p750 = pneg %p749
        $region90: #{zero_model_forward.1} parent=87 // pred_check_branch
          %752 = sbr.rel (%p750) target = $region92
        $region91: #{zero_model_forward.1} parent=87 // pred_region
          %v753 = vld [vmem:[%s703] sm:$0xff]
          %vm754 = vcmask 261120
          %755 = vst.msk [vmem:[#allocation2] sm:$0xff] %vm754, %v753
        $region92: #{zero_model_forward.1} parent=87 // pred_fallthru
          _
        %v756 = vlaneseq
        %v757 = vshrl.u32 %v756, 7
        %v758 = vlaneseq
        %v759 = vand.u32 %v758, 127
        %vm760 = vcmp.le.s32.totalorder %v759, %v757
        %v761 = vsel %vm760, 0.0, -1e+30
        %v762 = vld [vmem:[#allocation2] sm:$0xff]
        %v763 = vld [vmem:[%s706] sm:$0x1]
        %v764 = vld [vmem:[%s709] sm:$0x1]
        %vm765 = vcmask 261120
        %v766 = vsel %vm765, %v762, 0.0
        %767 = vadd.xlane.f32.xlu0 %v766
        %v768 = vpop.xlane.xlu0 %767
        %v769 = vrcp.pop 32.0
        %v770 = vmul.f32 %v768, %v769
        %v771 = vsub.f32 %v762, %v770
        %v772 = vmul.f32 %v771, %v771
        %v773 = vsel %vm765, %v772, 0.0
        %774 = vadd.xlane.f32.xlu0 %v773
        %v775 = vpop.xlane.xlu0 %774
        %v776 = vmul.f32 %v775, %v769
        %v777 = vadd.f32 %v776, 1e-05
        %v778 = vrsqrt.pop %v777
        %v779 = vmul.f32 %v771, %v778
        %v781 = vlaneseq
        %v782 = vshrl.u32 %v781, 7
        %v783 = vsub.s32 0, %v782
        %v784 = vrot.slane %v763, %v783
        %v786 = vmul.f32 %v779, %v784
        %v788 = vlaneseq
        %v789 = vshrl.u32 %v788, 7
        %v790 = vsub.s32 0, %v789
        %v791 = vrot.slane %v764, %v790
        %v793 = vadd.f32 %v786, %v791
        %v794 = vpack.c.bf16 %v793, %v793
        %v795 = vld [vmem:[%s714] sm:$0xf]
        %v796 = vld [vmem:[%s714 + $0x4] sm:$0xf]
        %v797 = vld [vmem:[%s714 + $0x8] sm:$0xf]
        %v798 = vld [vmem:[%s714 + $0xc] sm:$0xf]
        %v799 = vld [vmem:[%s717] sm:$0x1]
        %v801 = vlaneseq
        %v802 = vshrl.u32 %v801, 7
        %v803 = vsub.s32 0, %v802
        %v804 = vrot.slane %v799, %v803
        %v810 = vunpack.c.l.b16 %v795
        %v811 = vunpack.c.l.b16 %v796
        %v812 = vunpack.c.l.b16 %v797
        %v813 = vunpack.c.l.b16 %v798
        %v814 = vpack.c.b16 %v811, %v810
        %v815 = vpack.c.b16 %v813, %v812
        %v819 = vsel %vm765, %v794, 0
        %821 = vmatprep.subr.bf16.mxu0 0
        %822 = vmatpush1.bf16.msra.mxu0 0
        %823 = vmatprep.subr.bf16.mxu0 0
        %824 = vmatpush1.bf16.msra.mxu0 0
        %825 = vmatprep.subr.bf16.mxu0 0
        %826 = vmatpush1.bf16.msra.mxu0 0
        %827 = vmatprep.subr.bf16.mxu0 0
        %828 = vmatpush1.bf16.msra.mxu0 0
        %829 = vmatprep.subr.bf16.mxu0 0
        %830 = vmatpush1.bf16.msra.mxu0 0
        %831 = vmatprep.subr.bf16.mxu0 0
        %832 = vmatpush1.bf16.msra.mxu0 0
        %833 = vmatprep.subr.bf16.mxu0 0
        %834 = vmatpush1.bf16.msra.mxu0 %v815
        %835 = vmatprep.subr.bf16.mxu0 0
        %836 = vmatpush1.bf16.msra.mxu0 %v814
        %837 = vmatprep.subr.bf16.mxu0 0
        %838 = vmatpush2.bf16.msra.mxu0 0
        %839 = vmatprep.subr.bf16.mxu0 0
        %840 = vmatpush2.bf16.msra.mxu0 0
        %841 = vmatprep.subr.bf16.mxu0 0
        %842 = vmatpush2.bf16.msra.mxu0 0
        %843 = vmatprep.subr.bf16.mxu0 0
        %844 = vmatpush2.bf16.msra.mxu0 0
        %845 = vmatprep.subr.bf16.mxu0 0
        %846 = vmatpush2.bf16.msra.mxu0 0
        %847 = vmatprep.subr.bf16.mxu0 0
        %848 = vmatpush2.bf16.msra.mxu0 0
        %849 = vmatprep.subr.bf16.mxu0 0
        %850 = vmatpush2.bf16.msra.mxu0 0
        %851 = vmatprep.subr.bf16.mxu0 0
        %852 = vmatpush2.bf16.msra.mxu0 0
        %853 = vmatprep.mubr.bf16.mxu0 0
        %854 = vmatmul.mubr.bf16.gmra.mxu0 %v819
        %v855 = vpop.f32.mrf.mxu0
        %v856 = vadd.f32 %v804, %v855
        %v857 = vpop.f32.mrf.mxu0
        %v858 = vpop.f32.mrf.mxu0
        %v859 = vpop.f32.mrf.mxu0
        %860 = vdwg.mxu0
        %v861 = vpack.c.bf16 %v856, %v856
        %863 = vrot.lane.b32.xlu0 %v861, 96
        %v864 = vpop.permute.xlu0 %863
        %vm865 = vcmask 64512
        %v867 = vsel %vm865, %v861, 0
        %v870 = vsel %vm865, %v864, 0
        %872 = vmatprep.subr.bf16.mxu0 0
        %873 = vmatpush1.bf16.xpose.msra.mxu0 0
        %874 = vmatprep.subr.bf16.mxu0 0
        %875 = vmatpush1.bf16.xpose.msra.mxu0 0
        %876 = vmatprep.subr.bf16.mxu0 0
        %877 = vmatpush1.bf16.xpose.msra.mxu0 0
        %878 = vmatprep.subr.bf16.mxu0 0
        %879 = vmatpush1.bf16.xpose.msra.mxu0 0
        %880 = vmatprep.subr.bf16.mxu0 0
        %881 = vmatpush1.bf16.xpose.msra.mxu0 0
        %882 = vmatprep.subr.bf16.mxu0 0
        %883 = vmatpush1.bf16.xpose.msra.mxu0 0
        %884 = vmatprep.subr.bf16.mxu0 0
        %885 = vmatpush1.bf16.xpose.msra.mxu0 0
        %886 = vmatprep.subr.bf16.mxu0 0
        %887 = vmatpush1.bf16.xpose.msra.mxu0 %v870
        %888 = vmatprep.subr.bf16.mxu0 0
        %889 = vmatpush2.bf16.xpose.msra.mxu0 0
        %890 = vmatprep.subr.bf16.mxu0 0
        %891 = vmatpush2.bf16.xpose.msra.mxu0 0
        %892 = vmatprep.subr.bf16.mxu0 0
        %893 = vmatpush2.bf16.xpose.msra.mxu0 0
        %894 = vmatprep.subr.bf16.mxu0 0
        %895 = vmatpush2.bf16.xpose.msra.mxu0 0
        %896 = vmatprep.subr.bf16.mxu0 0
        %897 = vmatpush2.bf16.xpose.msra.mxu0 0
        %898 = vmatprep.subr.bf16.mxu0 0
        %899 = vmatpush2.bf16.xpose.msra.mxu0 0
        %900 = vmatprep.subr.bf16.mxu0 0
        %901 = vmatpush2.bf16.xpose.msra.mxu0 0
        %902 = vmatprep.subr.bf16.mxu0 0
        %903 = vmatpush2.bf16.xpose.msra.mxu0 0
        %904 = vmatprep.mubr.bf16.mxu0 0
        %905 = vmatmul.mubr.bf16.gmra.mxu0 %v867
        %v906 = vpop.f32.mrf.mxu0
        %v907 = vadd.f32 0.0, %v906
        %v908 = vpop.f32.mrf.mxu0
        %v909 = vpop.f32.mrf.mxu0
        %v910 = vpop.f32.mrf.mxu0
        %911 = vdwg.mxu0
        %v912 = vmul.f32 %v907, 0.35355338
        %v913 = vadd.f32 %v912, %v761
        %v914 = vsel %vm865, %v913, -inf
        %915 = vmax.xlane.f32.xlu0 %v914
        %v916 = vpop.xlane.xlu0 %915
        %v917 = vsub.f32 %v913, %v916
        %v918 = vmul.f32 %v917, 1.442695
        %v919 = vpow.pop %v918
        %v920 = vsel %vm865, %v919, 0.0
        %921 = vadd.xlane.f32.xlu0 %v920
        %v922 = vpop.xlane.xlu0 %921
        %v923 = vrcp.pop %v922
        %v924 = vmul.f32 %v919, %v923
        %v925 = vpack.c.bf16 %v924, %v924
        %926 = vrot.lane.b32.xlu0 %v861, 64
        %v927 = vpop.permute.xlu0 %926
        %v929 = vsel %vm865, %v925, 0
        %vm931 = vcmask 1043456
        %v933 = vsel %vm931, %v927, 0
        %935 = vmatprep.subr.bf16.mxu0 0
        %936 = vmatpush1.bf16.msra.mxu0 0
        %937 = vmatprep.subr.bf16.mxu0 0
        %938 = vmatpush1.bf16.msra.mxu0 0
        %939 = vmatprep.subr.bf16.mxu0 0
        %940 = vmatpush1.bf16.msra.mxu0 0
        %941 = vmatprep.subr.bf16.mxu0 0
        %942 = vmatpush1.bf16.msra.mxu0 0
        %943 = vmatprep.subr.bf16.mxu0 0
        %944 = vmatpush1.bf16.msra.mxu0 0
        %945 = vmatprep.subr.bf16.mxu0 0
        %946 = vmatpush1.bf16.msra.mxu0 0
        %947 = vmatprep.subr.bf16.mxu0 0
        %948 = vmatpush1.bf16.msra.mxu0 0
        %949 = vmatprep.subr.bf16.mxu0 0
        %950 = vmatpush1.bf16.msra.mxu0 %v933
        %951 = vmatprep.subr.bf16.mxu0 0
        %952 = vmatpush2.bf16.msra.mxu0 0
        %953 = vmatprep.subr.bf16.mxu0 0
        %954 = vmatpush2.bf16.msra.mxu0 0
        %955 = vmatprep.subr.bf16.mxu0 0
        %956 = vmatpush2.bf16.msra.mxu0 0
        %957 = vmatprep.subr.bf16.mxu0 0
        %958 = vmatpush2.bf16.msra.mxu0 0
        %959 = vmatprep.subr.bf16.mxu0 0
        %960 = vmatpush2.bf16.msra.mxu0 0
        %961 = vmatprep.subr.bf16.mxu0 0
        %962 = vmatpush2.bf16.msra.mxu0 0
        %963 = vmatprep.subr.bf16.mxu0 0
        %964 = vmatpush2.bf16.msra.mxu0 0
        %965 = vmatprep.subr.bf16.mxu0 0
        %966 = vmatpush2.bf16.msra.mxu0 0
        %967 = vmatprep.mubr.bf16.mxu0 0
        %968 = vmatmul.mubr.bf16.gmra.mxu0 %v929
        %v969 = vpop.f32.mrf.mxu0
        %v970 = vadd.f32 0.0, %v969
        %v971 = vpop.f32.mrf.mxu0
        %v972 = vpop.f32.mrf.mxu0
        %v973 = vpop.f32.mrf.mxu0
        %974 = vdwg.mxu0
        %975 = vst.msk [vmem:[#allocation3] sm:$0xff] %vm865, %v970
        %976 = vrot.lane.b32.xlu0 %v861, 120
        %v977 = vpop.permute.xlu0 %976
        %978 = vrot.lane.b32.xlu0 %v861, 88
        %v979 = vpop.permute.xlu0 %978
        %v981 = vsel %vm865, %v977, 0
        %v984 = vsel %vm865, %v979, 0
        %986 = vmatprep.subr.bf16.mxu0 0
        %987 = vmatpush1.bf16.xpose.msra.mxu0 0
        %988 = vmatprep.subr.bf16.mxu0 0
        %989 = vmatpush1.bf16.xpose.msra.mxu0 0
        %990 = vmatprep.subr.bf16.mxu0 0
        %991 = vmatpush1.bf16.xpose.msra.mxu0 0
        %992 = vmatprep.subr.bf16.mxu0 0
        %993 = vmatpush1.bf16.xpose.msra.mxu0 0
        %994 = vmatprep.subr.bf16.mxu0 0
        %995 = vmatpush1.bf16.xpose.msra.mxu0 0
        %996 = vmatprep.subr.bf16.mxu0 0
        %997 = vmatpush1.bf16.xpose.msra.mxu0 0
        %998 = vmatprep.subr.bf16.mxu0 0
        %999 = vmatpush1.bf16.xpose.msra.mxu0 0
        %1000 = vmatprep.subr.bf16.mxu0 0
        %1001 = vmatpush1.bf16.xpose.msra.mxu0 %v984
        %1002 = vmatprep.subr.bf16.mxu0 0
        %1003 = vmatpush2.bf16.xpose.msra.mxu0 0
        %1004 = vmatprep.subr.bf16.mxu0 0
        %1005 = vmatpush2.bf16.xpose.msra.mxu0 0
        %1006 = vmatprep.subr.bf16.mxu0 0
        %1007 = vmatpush2.bf16.xpose.msra.mxu0 0
        %1008 = vmatprep.subr.bf16.mxu0 0
        %1009 = vmatpush2.bf16.xpose.msra.mxu0 0
        %1010 = vmatprep.subr.bf16.mxu0 0
        %1011 = vmatpush2.bf16.xpose.msra.mxu0 0
        %1012 = vmatprep.subr.bf16.mxu0 0
        %1013 = vmatpush2.bf16.xpose.msra.mxu0 0
        %1014 = vmatprep.subr.bf16.mxu0 0
        %1015 = vmatpush2.bf16.xpose.msra.mxu0 0
        %1016 = vmatprep.subr.bf16.mxu0 0
        %1017 = vmatpush2.bf16.xpose.msra.mxu0 0
        %1018 = vmatprep.mubr.bf16.mxu0 0
        %1019 = vmatmul.mubr.bf16.gmra.mxu0 %v981
        %v1020 = vpop.f32.mrf.mxu0
        %v1021 = vadd.f32 0.0, %v1020
        %v1022 = vpop.f32.mrf.mxu0
        %v1023 = vpop.f32.mrf.mxu0
        %v1024 = vpop.f32.mrf.mxu0
        %1025 = vdwg.mxu0
        %v1026 = vmul.f32 %v1021, 0.35355338
        %v1027 = vadd.f32 %v1026, %v761
        %v1028 = vsel %vm865, %v1027, -inf
        %1029 = vmax.xlane.f32.xlu0 %v1028
        %v1030 = vpop.xlane.xlu0 %1029
        %v1031 = vsub.f32 %v1027, %v1030
        %v1032 = vmul.f32 %v1031, 1.442695
        %v1033 = vpow.pop %v1032
        %v1034 = vsel %vm865, %v1033, 0.0
        %1035 = vadd.xlane.f32.xlu0 %v1034
        %v1036 = vpop.xlane.xlu0 %1035
        %v1037 = vrcp.pop %v1036
        %v1038 = vmul.f32 %v1033, %v1037
        %v1039 = vpack.c.bf16 %v1038, %v1038
        %1040 = vrot.lane.b32.xlu0 %v861, 56
        %v1041 = vpop.permute.xlu0 %1040
        %v1043 = vsel %vm865, %v1039, 0
        %v1046 = vsel %vm931, %v1041, 0
        %1048 = vmatprep.subr.bf16.mxu0 0
        %1049 = vmatpush1.bf16.msra.mxu0 0
        %1050 = vmatprep.subr.bf16.mxu0 0
        %1051 = vmatpush1.bf16.msra.mxu0 0
        %1052 = vmatprep.subr.bf16.mxu0 0
        %1053 = vmatpush1.bf16.msra.mxu0 0
        %1054 = vmatprep.subr.bf16.mxu0 0
        %1055 = vmatpush1.bf16.msra.mxu0 0
        %1056 = vmatprep.subr.bf16.mxu0 0
        %1057 = vmatpush1.bf16.msra.mxu0 0
        %1058 = vmatprep.subr.bf16.mxu0 0
        %1059 = vmatpush1.bf16.msra.mxu0 0
        %1060 = vmatprep.subr.bf16.mxu0 0
        %1061 = vmatpush1.bf16.msra.mxu0 0
        %1062 = vmatprep.subr.bf16.mxu0 0
        %1063 = vmatpush1.bf16.msra.mxu0 %v1046
        %1064 = vmatprep.subr.bf16.mxu0 0
        %1065 = vmatpush2.bf16.msra.mxu0 0
        %1066 = vmatprep.subr.bf16.mxu0 0
        %1067 = vmatpush2.bf16.msra.mxu0 0
        %1068 = vmatprep.subr.bf16.mxu0 0
        %1069 = vmatpush2.bf16.msra.mxu0 0
        %1070 = vmatprep.subr.bf16.mxu0 0
        %1071 = vmatpush2.bf16.msra.mxu0 0
        %1072 = vmatprep.subr.bf16.mxu0 0
        %1073 = vmatpush2.bf16.msra.mxu0 0
        %1074 = vmatprep.subr.bf16.mxu0 0
        %1075 = vmatpush2.bf16.msra.mxu0 0
        %1076 = vmatprep.subr.bf16.mxu0 0
        %1077 = vmatpush2.bf16.msra.mxu0 0
        %1078 = vmatprep.subr.bf16.mxu0 0
        %1079 = vmatpush2.bf16.msra.mxu0 0
        %1080 = vmatprep.mubr.bf16.mxu0 0
        %1081 = vmatmul.mubr.bf16.gmra.mxu0 %v1043
        %v1082 = vpop.f32.mrf.mxu0
        %v1083 = vadd.f32 0.0, %v1082
        %v1084 = vpop.f32.mrf.mxu0
        %v1085 = vpop.f32.mrf.mxu0
        %v1086 = vpop.f32.mrf.mxu0
        %1087 = vdwg.mxu0
        %1089 = vrot.lane.b32.xlu0 %v1083, 8
        %v1090 = vpop.permute.xlu0 %1089
        %vm1092 = vcmask 130112
        %1093 = vst.msk [vmem:[#allocation3] sm:$0xff] %vm1092, %v1090
        %1094 = vrot.lane.b32.xlu0 %v861, 112
        %v1095 = vpop.permute.xlu0 %1094
        %1096 = vrot.lane.b32.xlu0 %v861, 80
        %v1097 = vpop.permute.xlu0 %1096
        %v1099 = vsel %vm865, %v1095, 0
        %v1102 = vsel %vm865, %v1097, 0
        %1104 = vmatprep.subr.bf16.mxu0 0
        %1105 = vmatpush1.bf16.xpose.msra.mxu0 0
        %1106 = vmatprep.subr.bf16.mxu0 0
        %1107 = vmatpush1.bf16.xpose.msra.mxu0 0
        %1108 = vmatprep.subr.bf16.mxu0 0
        %1109 = vmatpush1.bf16.xpose.msra.mxu0 0
        %1110 = vmatprep.subr.bf16.mxu0 0
        %1111 = vmatpush1.bf16.xpose.msra.mxu0 0
        %1112 = vmatprep.subr.bf16.mxu0 0
        %1113 = vmatpush1.bf16.xpose.msra.mxu0 0
        %1114 = vmatprep.subr.bf16.mxu0 0
        %1115 = vmatpush1.bf16.xpose.msra.mxu0 0
        %1116 = vmatprep.subr.bf16.mxu0 0
        %1117 = vmatpush1.bf16.xpose.msra.mxu0 0
        %1118 = vmatprep.subr.bf16.mxu0 0
        %1119 = vmatpush1.bf16.xpose.msra.mxu0 %v1102
        %1120 = vmatprep.subr.bf16.mxu0 0
        %1121 = vmatpush2.bf16.xpose.msra.mxu0 0
        %1122 = vmatprep.subr.bf16.mxu0 0
        %1123 = vmatpush2.bf16.xpose.msra.mxu0 0
        %1124 = vmatprep.subr.bf16.mxu0 0
        %1125 = vmatpush2.bf16.xpose.msra.mxu0 0
        %1126 = vmatprep.subr.bf16.mxu0 0
        %1127 = vmatpush2.bf16.xpose.msra.mxu0 0
        %1128 = vmatprep.subr.bf16.mxu0 0
        %1129 = vmatpush2.bf16.xpose.msra.mxu0 0
        %1130 = vmatprep.subr.bf16.mxu0 0
        %1131 = vmatpush2.bf16.xpose.msra.mxu0 0
        %1132 = vmatprep.subr.bf16.mxu0 0
        %1133 = vmatpush2.bf16.xpose.msra.mxu0 0
        %1134 = vmatprep.subr.bf16.mxu0 0
        %1135 = vmatpush2.bf16.xpose.msra.mxu0 0
        %1136 = vmatprep.mubr.bf16.mxu0 0
        %1137 = vmatmul.mubr.bf16.gmra.mxu0 %v1099
        %v1138 = vpop.f32.mrf.mxu0
        %v1139 = vadd.f32 0.0, %v1138
        %v1140 = vpop.f32.mrf.mxu0
        %v1141 = vpop.f32.mrf.mxu0
        %v1142 = vpop.f32.mrf.mxu0
        %1143 = vdwg.mxu0
        %v1144 = vmul.f32 %v1139, 0.35355338
        %v1145 = vadd.f32 %v1144, %v761
        %v1146 = vsel %vm865, %v1145, -inf
        %1147 = vmax.xlane.f32.xlu0 %v1146
        %v1148 = vpop.xlane.xlu0 %1147
        %v1149 = vsub.f32 %v1145, %v1148
        %v1150 = vmul.f32 %v1149, 1.442695
        %v1151 = vpow.pop %v1150
        %v1152 = vsel %vm865, %v1151, 0.0
        %1153 = vadd.xlane.f32.xlu0 %v1152
        %v1154 = vpop.xlane.xlu0 %1153
        %v1155 = vrcp.pop %v1154
        %v1156 = vmul.f32 %v1151, %v1155
        %v1157 = vpack.c.bf16 %v1156, %v1156
        %1158 = vrot.lane.b32.xlu0 %v861, 48
        %v1159 = vpop.permute.xlu0 %1158
        %v1161 = vsel %vm865, %v1157, 0
        %v1164 = vsel %vm931, %v1159, 0
        %1166 = vmatprep.subr.bf16.mxu0 0
        %1167 = vmatpush1.bf16.msra.mxu0 0
        %1168 = vmatprep.subr.bf16.mxu0 0
        %1169 = vmatpush1.bf16.msra.mxu0 0
        %1170 = vmatprep.subr.bf16.mxu0 0
        %1171 = vmatpush1.bf16.msra.mxu0 0
        %1172 = vmatprep.subr.bf16.mxu0 0
        %1173 = vmatpush1.bf16.msra.mxu0 0
        %1174 = vmatprep.subr.bf16.mxu0 0
        %1175 = vmatpush1.bf16.msra.mxu0 0
        %1176 = vmatprep.subr.bf16.mxu0 0
        %1177 = vmatpush1.bf16.msra.mxu0 0
        %1178 = vmatprep.subr.bf16.mxu0 0
        %1179 = vmatpush1.bf16.msra.mxu0 0
        %1180 = vmatprep.subr.bf16.mxu0 0
        %1181 = vmatpush1.bf16.msra.mxu0 %v1164
        %1182 = vmatprep.subr.bf16.mxu0 0
        %1183 = vmatpush2.bf16.msra.mxu0 0
        %1184 = vmatprep.subr.bf16.mxu0 0
        %1185 = vmatpush2.bf16.msra.mxu0 0
        %1186 = vmatprep.subr.bf16.mxu0 0
        %1187 = vmatpush2.bf16.msra.mxu0 0
        %1188 = vmatprep.subr.bf16.mxu0 0
        %1189 = vmatpush2.bf16.msra.mxu0 0
        %1190 = vmatprep.subr.bf16.mxu0 0
        %1191 = vmatpush2.bf16.msra.mxu0 0
        %1192 = vmatprep.subr.bf16.mxu0 0
        %1193 = vmatpush2.bf16.msra.mxu0 0
        %1194 = vmatprep.subr.bf16.mxu0 0
        %1195 = vmatpush2.bf16.msra.mxu0 0
        %1196 = vmatprep.subr.bf16.mxu0 0
        %1197 = vmatpush2.bf16.msra.mxu0 0
        %1198 = vmatprep.mubr.bf16.mxu0 0
        %1199 = vmatmul.mubr.bf16.gmra.mxu0 %v1161
        %v1200 = vpop.f32.mrf.mxu0
        %v1201 = vadd.f32 0.0, %v1200
        %v1202 = vpop.f32.mrf.mxu0
        %v1203 = vpop.f32.mrf.mxu0
        %v1204 = vpop.f32.mrf.mxu0
        %1205 = vdwg.mxu0
        %1207 = vrot.lane.b32.xlu0 %v1201, 16
        %v1208 = vpop.permute.xlu0 %1207
        %vm1210 = vcmask 195712
        %1211 = vst.msk [vmem:[#allocation3] sm:$0xff] %vm1210, %v1208
        %1212 = vrot.lane.b32.xlu0 %v861, 104
        %v1213 = vpop.permute.xlu0 %1212
        %1214 = vrot.lane.b32.xlu0 %v861, 72
        %v1215 = vpop.permute.xlu0 %1214
        %v1217 = vsel %vm865, %v1213, 0
        %v1220 = vsel %vm865, %v1215, 0
        %1222 = vmatprep.subr.bf16.mxu0 0
        %1223 = vmatpush1.bf16.xpose.msra.mxu0 0
        %1224 = vmatprep.subr.bf16.mxu0 0
        %1225 = vmatpush1.bf16.xpose.msra.mxu0 0
        %1226 = vmatprep.subr.bf16.mxu0 0
        %1227 = vmatpush1.bf16.xpose.msra.mxu0 0
        %1228 = vmatprep.subr.bf16.mxu0 0
        %1229 = vmatpush1.bf16.xpose.msra.mxu0 0
        %1230 = vmatprep.subr.bf16.mxu0 0
        %1231 = vmatpush1.bf16.xpose.msra.mxu0 0
        %1232 = vmatprep.subr.bf16.mxu0 0
        %1233 = vmatpush1.bf16.xpose.msra.mxu0 0
        %1234 = vmatprep.subr.bf16.mxu0 0
        %1235 = vmatpush1.bf16.xpose.msra.mxu0 0
        %1236 = vmatprep.subr.bf16.mxu0 0
        %1237 = vmatpush1.bf16.xpose.msra.mxu0 %v1220
        %1238 = vmatprep.subr.bf16.mxu0 0
        %1239 = vmatpush2.bf16.xpose.msra.mxu0 0
        %1240 = vmatprep.subr.bf16.mxu0 0
        %1241 = vmatpush2.bf16.xpose.msra.mxu0 0
        %1242 = vmatprep.subr.bf16.mxu0 0
        %1243 = vmatpush2.bf16.xpose.msra.mxu0 0
        %1244 = vmatprep.subr.bf16.mxu0 0
        %1245 = vmatpush2.bf16.xpose.msra.mxu0 0
        %1246 = vmatprep.subr.bf16.mxu0 0
        %1247 = vmatpush2.bf16.xpose.msra.mxu0 0
        %1248 = vmatprep.subr.bf16.mxu0 0
        %1249 = vmatpush2.bf16.xpose.msra.mxu0 0
        %1250 = vmatprep.subr.bf16.mxu0 0
        %1251 = vmatpush2.bf16.xpose.msra.mxu0 0
        %1252 = vmatprep.subr.bf16.mxu0 0
        %1253 = vmatpush2.bf16.xpose.msra.mxu0 0
        %1254 = vmatprep.mubr.bf16.mxu0 0
        %1255 = vmatmul.mubr.bf16.gmra.mxu0 %v1217
        %v1256 = vpop.f32.mrf.mxu0
        %v1257 = vadd.f32 0.0, %v1256
        %v1258 = vpop.f32.mrf.mxu0
        %v1259 = vpop.f32.mrf.mxu0
        %v1260 = vpop.f32.mrf.mxu0
        %1261 = vdwg.mxu0
        %v1262 = vmul.f32 %v1257, 0.35355338
        %v1263 = vadd.f32 %v1262, %v761
        %v1264 = vsel %vm865, %v1263, -inf
        %1265 = vmax.xlane.f32.xlu0 %v1264
        %v1266 = vpop.xlane.xlu0 %1265
        %v1267 = vsub.f32 %v1263, %v1266
        %v1268 = vmul.f32 %v1267, 1.442695
        %v1269 = vpow.pop %v1268
        %v1270 = vsel %vm865, %v1269, 0.0
        %1271 = vadd.xlane.f32.xlu0 %v1270
        %v1272 = vpop.xlane.xlu0 %1271
        %v1273 = vrcp.pop %v1272
        %v1274 = vmul.f32 %v1269, %v1273
        %v1275 = vpack.c.bf16 %v1274, %v1274
        %1276 = vrot.lane.b32.xlu0 %v861, 40
        %v1277 = vpop.permute.xlu0 %1276
        %v1279 = vsel %vm865, %v1275, 0
        %v1282 = vsel %vm931, %v1277, 0
        %1284 = vmatprep.subr.bf16.mxu0 0
        %1285 = vmatpush1.bf16.msra.mxu0 0
        %1286 = vmatprep.subr.bf16.mxu0 0
        %1287 = vmatpush1.bf16.msra.mxu0 0
        %1288 = vmatprep.subr.bf16.mxu0 0
        %1289 = vmatpush1.bf16.msra.mxu0 0
        %1290 = vmatprep.subr.bf16.mxu0 0
        %1291 = vmatpush1.bf16.msra.mxu0 0
        %1292 = vmatprep.subr.bf16.mxu0 0
        %1293 = vmatpush1.bf16.msra.mxu0 0
        %1294 = vmatprep.subr.bf16.mxu0 0
        %1295 = vmatpush1.bf16.msra.mxu0 0
        %1296 = vmatprep.subr.bf16.mxu0 0
        %1297 = vmatpush1.bf16.msra.mxu0 0
        %1298 = vmatprep.subr.bf16.mxu0 0
        %1299 = vmatpush1.bf16.msra.mxu0 %v1282
        %1300 = vmatprep.subr.bf16.mxu0 0
        %1301 = vmatpush2.bf16.msra.mxu0 0
        %1302 = vmatprep.subr.bf16.mxu0 0
        %1303 = vmatpush2.bf16.msra.mxu0 0
        %1304 = vmatprep.subr.bf16.mxu0 0
        %1305 = vmatpush2.bf16.msra.mxu0 0
        %1306 = vmatprep.subr.bf16.mxu0 0
        %1307 = vmatpush2.bf16.msra.mxu0 0
        %1308 = vmatprep.subr.bf16.mxu0 0
        %1309 = vmatpush2.bf16.msra.mxu0 0
        %1310 = vmatprep.subr.bf16.mxu0 0
        %1311 = vmatpush2.bf16.msra.mxu0 0
        %1312 = vmatprep.subr.bf16.mxu0 0
        %1313 = vmatpush2.bf16.msra.mxu0 0
        %1314 = vmatprep.subr.bf16.mxu0 0
        %1315 = vmatpush2.bf16.msra.mxu0 0
        %1316 = vmatprep.mubr.bf16.mxu0 0
        %1317 = vmatmul.mubr.bf16.gmra.mxu0 %v1279
        %v1318 = vpop.f32.mrf.mxu0
        %v1319 = vadd.f32 0.0, %v1318
        %v1320 = vpop.f32.mrf.mxu0
        %v1321 = vpop.f32.mrf.mxu0
        %v1322 = vpop.f32.mrf.mxu0
        %1323 = vdwg.mxu0
        %1325 = vrot.lane.b32.xlu0 %v1319, 24
        %v1326 = vpop.permute.xlu0 %1325
        %vm1328 = vcmask 261312
        %1329 = vst.msk [vmem:[#allocation3] sm:$0xff] %vm1328, %v1326
        %v1330 = vld [vmem:[#allocation3] sm:$0xff]
        %v1331 = vpack.c.bf16 %v1330, %v1330
        %v1332 = vld [vmem:[%s722] sm:$0xf]
        %v1333 = vld [vmem:[%s722 + $0x4] sm:$0xf]
        %v1334 = vld [vmem:[%s722 + $0x8] sm:$0xf]
        %v1335 = vld [vmem:[%s722 + $0xc] sm:$0xf]
        %v1336 = vld [vmem:[%s725] sm:$0x1]
        %v1338 = vlaneseq
        %v1339 = vshrl.u32 %v1338, 7
        %v1340 = vsub.s32 0, %v1339
        %v1341 = vrot.slane %v1336, %v1340
        %v1347 = vunpack.c.l.b16 %v1332
        %v1348 = vunpack.c.l.b16 %v1333
        %v1349 = vunpack.c.l.b16 %v1334
        %v1350 = vunpack.c.l.b16 %v1335
        %v1351 = vpack.c.b16 %v1348, %v1347
        %v1352 = vpack.c.b16 %v1350, %v1349
        %v1356 = vsel %vm765, %v1331, 0
        %1358 = vmatprep.subr.bf16.mxu0 0
        %1359 = vmatpush1.bf16.msra.mxu0 0
        %1360 = vmatprep.subr.bf16.mxu0 0
        %1361 = vmatpush1.bf16.msra.mxu0 0
        %1362 = vmatprep.subr.bf16.mxu0 0
        %1363 = vmatpush1.bf16.msra.mxu0 0
        %1364 = vmatprep.subr.bf16.mxu0 0
        %1365 = vmatpush1.bf16.msra.mxu0 0
        %1366 = vmatprep.subr.bf16.mxu0 0
        %1367 = vmatpush1.bf16.msra.mxu0 0
        %1368 = vmatprep.subr.bf16.mxu0 0
        %1369 = vmatpush1.bf16.msra.mxu0 0
        %1370 = vmatprep.subr.bf16.mxu0 0
        %1371 = vmatpush1.bf16.msra.mxu0 %v1352
        %1372 = vmatprep.subr.bf16.mxu0 0
        %1373 = vmatpush1.bf16.msra.mxu0 %v1351
        %1374 = vmatprep.subr.bf16.mxu0 0
        %1375 = vmatpush2.bf16.msra.mxu0 0
        %1376 = vmatprep.subr.bf16.mxu0 0
        %1377 = vmatpush2.bf16.msra.mxu0 0
        %1378 = vmatprep.subr.bf16.mxu0 0
        %1379 = vmatpush2.bf16.msra.mxu0 0
        %1380 = vmatprep.subr.bf16.mxu0 0
        %1381 = vmatpush2.bf16.msra.mxu0 0
        %1382 = vmatprep.subr.bf16.mxu0 0
        %1383 = vmatpush2.bf16.msra.mxu0 0
        %1384 = vmatprep.subr.bf16.mxu0 0
        %1385 = vmatpush2.bf16.msra.mxu0 0
        %1386 = vmatprep.subr.bf16.mxu0 0
        %1387 = vmatpush2.bf16.msra.mxu0 0
        %1388 = vmatprep.subr.bf16.mxu0 0
        %1389 = vmatpush2.bf16.msra.mxu0 0
        %1390 = vmatprep.mubr.bf16.mxu0 0
        %1391 = vmatmul.mubr.bf16.gmra.mxu0 %v1356
        %v1392 = vpop.f32.mrf.mxu0
        %v1393 = vadd.f32 %v1341, %v1392
        %v1394 = vpop.f32.mrf.mxu0
        %v1395 = vpop.f32.mrf.mxu0
        %v1396 = vpop.f32.mrf.mxu0
        %1397 = vdwg.mxu0
        %v1398 = vadd.f32 %v762, %v1393
        %v1399 = vld [vmem:[%s728] sm:$0x1]
        %v1400 = vld [vmem:[%s731] sm:$0x1]
        %v1401 = vsel %vm765, %v1398, 0.0
        %1402 = vadd.xlane.f32.xlu0 %v1401
        %v1403 = vpop.xlane.xlu0 %1402
        %v1404 = vmul.f32 %v1403, %v769
        %v1405 = vsub.f32 %v1398, %v1404
        %v1406 = vmul.f32 %v1405, %v1405
        %v1407 = vsel %vm765, %v1406, 0.0
        %1408 = vadd.xlane.f32.xlu0 %v1407
        %v1409 = vpop.xlane.xlu0 %1408
        %v1410 = vmul.f32 %v1409, %v769
        %v1411 = vadd.f32 %v1410, 1e-05
        %v1412 = vrsqrt.pop %v1411
        %v1413 = vmul.f32 %v1405, %v1412
        %v1415 = vlaneseq
        %v1416 = vshrl.u32 %v1415, 7
        %v1417 = vsub.s32 0, %v1416
        %v1418 = vrot.slane %v1399, %v1417
        %v1420 = vmul.f32 %v1413, %v1418
        %v1422 = vlaneseq
        %v1423 = vshrl.u32 %v1422, 7
        %v1424 = vsub.s32 0, %v1423
        %v1425 = vrot.slane %v1400, %v1424
        %v1427 = vadd.f32 %v1420, %v1425
        %v1428 = vpack.c.bf16 %v1427, %v1427
        %v1429 = vld [vmem:[%s736] sm:$0xf]
        %v1430 = vld [vmem:[%s736 + $0x4] sm:$0xf]
        %v1431 = vld [vmem:[%s736 + $0x8] sm:$0xf]
        %v1432 = vld [vmem:[%s736 + $0xc] sm:$0xf]
        %v1433 = vld [vmem:[%s739] sm:$0x1]
        %v1435 = vlaneseq
        %v1436 = vshrl.u32 %v1435, 7
        %v1437 = vsub.s32 0, %v1436
        %v1438 = vrot.slane %v1433, %v1437
        %v1444 = vunpack.c.l.b16 %v1429
        %v1445 = vunpack.c.l.b16 %v1430
        %v1446 = vunpack.c.l.b16 %v1431
        %v1447 = vunpack.c.l.b16 %v1432
        %v1448 = vpack.c.b16 %v1445, %v1444
        %v1449 = vpack.c.b16 %v1447, %v1446
        %v1453 = vsel %vm765, %v1428, 0
        %1455 = vmatprep.subr.bf16.mxu0 0
        %1456 = vmatpush1.bf16.msra.mxu0 0
        %1457 = vmatprep.subr.bf16.mxu0 0
        %1458 = vmatpush1.bf16.msra.mxu0 0
        %1459 = vmatprep.subr.bf16.mxu0 0
        %1460 = vmatpush1.bf16.msra.mxu0 0
        %1461 = vmatprep.subr.bf16.mxu0 0
        %1462 = vmatpush1.bf16.msra.mxu0 0
        %1463 = vmatprep.subr.bf16.mxu0 0
        %1464 = vmatpush1.bf16.msra.mxu0 0
        %1465 = vmatprep.subr.bf16.mxu0 0
        %1466 = vmatpush1.bf16.msra.mxu0 0
        %1467 = vmatprep.subr.bf16.mxu0 0
        %1468 = vmatpush1.bf16.msra.mxu0 %v1449
        %1469 = vmatprep.subr.bf16.mxu0 0
        %1470 = vmatpush1.bf16.msra.mxu0 %v1448
        %1471 = vmatprep.subr.bf16.mxu0 0
        %1472 = vmatpush2.bf16.msra.mxu0 0
        %1473 = vmatprep.subr.bf16.mxu0 0
        %1474 = vmatpush2.bf16.msra.mxu0 0
        %1475 = vmatprep.subr.bf16.mxu0 0
        %1476 = vmatpush2.bf16.msra.mxu0 0
        %1477 = vmatprep.subr.bf16.mxu0 0
        %1478 = vmatpush2.bf16.msra.mxu0 0
        %1479 = vmatprep.subr.bf16.mxu0 0
        %1480 = vmatpush2.bf16.msra.mxu0 0
        %1481 = vmatprep.subr.bf16.mxu0 0
        %1482 = vmatpush2.bf16.msra.mxu0 0
        %1483 = vmatprep.subr.bf16.mxu0 0
        %1484 = vmatpush2.bf16.msra.mxu0 0
        %1485 = vmatprep.subr.bf16.mxu0 0
        %1486 = vmatpush2.bf16.msra.mxu0 0
        %1487 = vmatprep.mubr.bf16.mxu0 0
        %1488 = vmatmul.mubr.bf16.gmra.mxu0 %v1453
        %v1489 = vpop.f32.mrf.mxu0
        %v1490 = vadd.f32 %v1438, %v1489
        %v1491 = vpop.f32.mrf.mxu0
        %v1492 = vpop.f32.mrf.mxu0
        %v1493 = vpop.f32.mrf.mxu0
        %1494 = vdwg.mxu0
        %v1495 = vmul.f32 %v1490, %v1490
        %v1496 = vmul.f32 %v1490, %v1495
        %v1497 = vmul.f32 %v1496, 0.044715
        %v1498 = vadd.f32 %v1490, %v1497
        %v1499 = vmul.f32 %v1498, 0.7978846
        %v1500 = vtanh.pop %v1499
        %v1501 = vadd.f32 %v1500, 1.0
        %v1502 = vmul.f32 %v1501, 0.5
        %v1503 = vmul.f32 %v1490, %v1502
        %v1504 = vpack.c.bf16 %v1503, %v1503
        %v1505 = vld [vmem:[%s744] sm:$0xf]
        %v1506 = vld [vmem:[%s744 + $0x4] sm:$0xf]
        %v1507 = vld [vmem:[%s744 + $0x8] sm:$0xf]
        %v1508 = vld [vmem:[%s744 + $0xc] sm:$0xf]
        %v1509 = vld [vmem:[%s744 + $0x10] sm:$0xf]
        %v1510 = vld [vmem:[%s744 + $0x14] sm:$0xf]
        %v1511 = vld [vmem:[%s744 + $0x18] sm:$0xf]
        %v1512 = vld [vmem:[%s744 + $0x1c] sm:$0xf]
        %v1521 = vunpack.c.l.b16 %v1505
        %v1522 = vunpack.c.l.b16 %v1506
        %v1523 = vunpack.c.l.b16 %v1507
        %v1524 = vunpack.c.l.b16 %v1508
        %v1525 = vunpack.c.l.b16 %v1509
        %v1526 = vunpack.c.l.b16 %v1510
        %v1527 = vunpack.c.l.b16 %v1511
        %v1528 = vunpack.c.l.b16 %v1512
        %v1529 = vpack.c.b16 %v1522, %v1521
        %v1530 = vpack.c.b16 %v1524, %v1523
        %v1531 = vpack.c.b16 %v1526, %v1525
        %v1532 = vpack.c.b16 %v1528, %v1527
        %vm1537 = vcmask 523264
        %v1539 = vsel %vm1537, %v1504, 0
        %1541 = vmatprep.subr.bf16.mxu0 0
        %1542 = vmatpush1.bf16.msra.mxu0 0
        %1543 = vmatprep.subr.bf16.mxu0 0
        %1544 = vmatpush1.bf16.msra.mxu0 0
        %1545 = vmatprep.subr.bf16.mxu0 0
        %1546 = vmatpush1.bf16.msra.mxu0 0
        %1547 = vmatprep.subr.bf16.mxu0 0
        %1548 = vmatpush1.bf16.msra.mxu0 0
        %1549 = vmatprep.subr.bf16.mxu0 0
        %1550 = vmatpush1.bf16.msra.mxu0 %v1532
        %1551 = vmatprep.subr.bf16.mxu0 0
        %1552 = vmatpush1.bf16.msra.mxu0 %v1531
        %1553 = vmatprep.subr.bf16.mxu0 0
        %1554 = vmatpush1.bf16.msra.mxu0 %v1530
        %1555 = vmatprep.subr.bf16.mxu0 0
        %1556 = vmatpush1.bf16.msra.mxu0 %v1529
        %1557 = vmatprep.subr.bf16.mxu0 0
        %1558 = vmatpush2.bf16.msra.mxu0 0
        %1559 = vmatprep.subr.bf16.mxu0 0
        %1560 = vmatpush2.bf16.msra.mxu0 0
        %1561 = vmatprep.subr.bf16.mxu0 0
        %1562 = vmatpush2.bf16.msra.mxu0 0
        %1563 = vmatprep.subr.bf16.mxu0 0
        %1564 = vmatpush2.bf16.msra.mxu0 0
        %1565 = vmatprep.subr.bf16.mxu0 0
        %1566 = vmatpush2.bf16.msra.mxu0 0
        %1567 = vmatprep.subr.bf16.mxu0 0
        %1568 = vmatpush2.bf16.msra.mxu0 0
        %1569 = vmatprep.subr.bf16.mxu0 0
        %1570 = vmatpush2.bf16.msra.mxu0 0
        %1571 = vmatprep.subr.bf16.mxu0 0
        %1572 = vmatpush2.bf16.msra.mxu0 0
        %1573 = vmatprep.mubr.bf16.mxu0 0
        %1574 = vmatmul.mubr.bf16.gmra.mxu0 %v1539
        %v1575 = vpop.f32.mrf.mxu0
        %v1576 = vadd.f32 0.0, %v1575
        %v1577 = vpop.f32.mrf.mxu0
        %v1578 = vpop.f32.mrf.mxu0
        %v1579 = vpop.f32.mrf.mxu0
        %1580 = vdwg.mxu0
        %v1581 = vadd.f32 %v1398, %v1576
        %v1582 = vld [vmem:[%s747] sm:$0x1]
        %v1584 = vlaneseq
        %v1585 = vshrl.u32 %v1584, 7
        %v1586 = vsub.s32 0, %v1585
        %v1587 = vrot.slane %v1582, %v1586
        %v1589 = vadd.f32 %v1581, %v1587
        %1590 = vst.msk [vmem:[#allocation2] sm:$0xff] %vm765, %v1589
        %p1591 = scmp.eq.s32.totalorder %s36, 1
        // Predicated region
        $region93: #{zero_model_forward.1} parent=87 // pred_check
          %p1592 = pneg %p1591
        $region94: #{zero_model_forward.1} parent=87 // pred_check_branch
          %1594 = sbr.rel (%p1592) target = $region96
        $region95: #{zero_model_forward.1} parent=87 // pred_region
          %v1595 = vld [vmem:[#allocation2] sm:$0xff]
          %v1596 = vld [vmem:[%s13] sm:$0x1]
          %v1597 = vld [vmem:[%s14] sm:$0x1]
          %v1598 = vsel %vm765, %v1595, 0.0
          %1599 = vadd.xlane.f32.xlu0 %v1598
          %v1600 = vpop.xlane.xlu0 %1599
          %v1601 = vmul.f32 %v1600, %v769
          %v1602 = vsub.f32 %v1595, %v1601
          %v1603 = vmul.f32 %v1602, %v1602
          %v1604 = vsel %vm765, %v1603, 0.0
          %1605 = vadd.xlane.f32.xlu0 %v1604
          %v1606 = vpop.xlane.xlu0 %1605
          %v1607 = vmul.f32 %v1606, %v769
          %v1608 = vadd.f32 %v1607, 1e-05
          %v1609 = vrsqrt.pop %v1608
          %v1610 = vmul.f32 %v1602, %v1609
          %v1612 = vlaneseq
          %v1613 = vshrl.u32 %v1612, 7
          %v1614 = vsub.s32 0, %v1613
          %v1615 = vrot.slane %v1596, %v1614
          %v1617 = vmul.f32 %v1610, %v1615
          %v1619 = vlaneseq
          %v1620 = vshrl.u32 %v1619, 7
          %v1621 = vsub.s32 0, %v1620
          %v1622 = vrot.slane %v1597, %v1621
          %v1624 = vadd.f32 %v1617, %v1622
          %v1625 = vpack.c.bf16 %v1624, %v1624
          %v1626 = vld [vmem:[%s15] sm:$0xf]
          %v1627 = vld [vmem:[%s15 + $0x4] sm:$0xf]
          %v1628 = vld [vmem:[%s15 + $0x8] sm:$0xf]
          %v1629 = vld [vmem:[%s15 + $0xc] sm:$0xf]
          %v1630 = vld [vmem:[%s16] sm:$0x1]
          %v1632 = vlaneseq
          %v1633 = vshrl.u32 %v1632, 7
          %v1634 = vsub.s32 0, %v1633
          %v1635 = vrot.slane %v1630, %v1634
          %v1641 = vunpack.c.l.b16 %v1626
          %v1642 = vunpack.c.l.b16 %v1627
          %v1643 = vunpack.c.l.b16 %v1628
          %v1644 = vunpack.c.l.b16 %v1629
          %v1645 = vpack.c.b16 %v1642, %v1641
          %v1646 = vpack.c.b16 %v1644, %v1643
          %v1650 = vsel %vm765, %v1625, 0
          %1652 = vmatprep.subr.bf16.mxu0 0
          %1653 = vmatpush1.bf16.msra.mxu0 0
          %1654 = vmatprep.subr.bf16.mxu0 0
          %1655 = vmatpush1.bf16.msra.mxu0 0
          %1656 = vmatprep.subr.bf16.mxu0 0
          %1657 = vmatpush1.bf16.msra.mxu0 0
          %1658 = vmatprep.subr.bf16.mxu0 0
          %1659 = vmatpush1.bf16.msra.mxu0 0
          %1660 = vmatprep.subr.bf16.mxu0 0
          %1661 = vmatpush1.bf16.msra.mxu0 0
          %1662 = vmatprep.subr.bf16.mxu0 0
          %1663 = vmatpush1.bf16.msra.mxu0 0
          %1664 = vmatprep.subr.bf16.mxu0 0
          %1665 = vmatpush1.bf16.msra.mxu0 %v1646
          %1666 = vmatprep.subr.bf16.mxu0 0
          %1667 = vmatpush1.bf16.msra.mxu0 %v1645
          %1668 = vmatprep.subr.bf16.mxu0 0
          %1669 = vmatpush2.bf16.msra.mxu0 0
          %1670 = vmatprep.subr.bf16.mxu0 0
          %1671 = vmatpush2.bf16.msra.mxu0 0
          %1672 = vmatprep.subr.bf16.mxu0 0
          %1673 = vmatpush2.bf16.msra.mxu0 0
          %1674 = vmatprep.subr.bf16.mxu0 0
          %1675 = vmatpush2.bf16.msra.mxu0 0
          %1676 = vmatprep.subr.bf16.mxu0 0
          %1677 = vmatpush2.bf16.msra.mxu0 0
          %1678 = vmatprep.subr.bf16.mxu0 0
          %1679 = vmatpush2.bf16.msra.mxu0 0
          %1680 = vmatprep.subr.bf16.mxu0 0
          %1681 = vmatpush2.bf16.msra.mxu0 0
          %1682 = vmatprep.subr.bf16.mxu0 0
          %1683 = vmatpush2.bf16.msra.mxu0 0
          %1684 = vmatprep.mubr.bf16.mxu0 0
          %1685 = vmatmul.mubr.bf16.gmra.mxu0 %v1650
          %v1686 = vpop.f32.mrf.mxu0
          %v1687 = vadd.f32 %v1635, %v1686
          %v1688 = vpop.f32.mrf.mxu0
          %v1689 = vpop.f32.mrf.mxu0
          %v1690 = vpop.f32.mrf.mxu0
          %1691 = vdwg.mxu0
          %1692 = vst [vmem:[%s699] sm:$0xff] %v1687
        $region96: #{zero_model_forward.1} parent=87 // pred_fallthru
          _
        %s1693 = sand.u32 %s473, 1
        %s1694 = scalar_lea.sflag [#allocation5], %s1693
        %s1695 = sand.u32 %s473, 1
        %s1696 = smul.addr %s1695, 8
        %s1697 = scalar_lea.vmem [#allocation4], %s1696
        // Predicated region
        $region97: #{zero_model_forward.1} parent=87 // pred_check
          %p1698 = pneg %p483
        $region98: #{zero_model_forward.1} parent=87 // pred_check_branch
          %1700 = sbr.rel (%p1698) target = $region100
        $region99: #{zero_model_forward.1} parent=87 // pred_region
          %s1702 = ssub.s32 128, 128
          %1703 = vsyncadd %s1694, %s1702
          %s1704 = smul.addr %s35, 128
          %s1705 = scalar_lea.hbm %s17, %s1704
          %s1707 = sshll.u32 %s1697, 4
          %s1708 = int_to_ptr.vmem [resolvable:$true] %s1707
          %1710 = dma.vmem_to_hbm [thread:$0]  %s1708, 128, %s1705, %s1694
        $region100: #{zero_model_forward.1} parent=87 // pred_fallthru
          _
      $region88: #{zero_model_forward.1} parent=5 // pred_fallthru
        _
      %p1711 = scmp.le.s32.totalorder 2, %s26
      // Predicated region
      $region101: #{zero_model_forward.1} parent=5 // pred_check
        %p1712 = pneg %p1711
      $region102: #{zero_model_forward.1} parent=5 // pred_check_branch
        %1714 = sbr.rel (%p1712) target = $region104
      $region103: #{zero_model_forward.1} parent=5 // pred_region
        %s1715 = ssub.s32 %s26, 2
        // Predicated region
        $region105: #{zero_model_forward.1} parent=103 // pred_check
          %p1716 = pneg %p489
        $region106: #{zero_model_forward.1} parent=103 // pred_check_branch
          %1718 = sbr.rel (%p1716) target = $region108
        $region107: #{zero_model_forward.1} parent=103 // pred_region
          %s1719 = sand.u32 %s474, 1
          %s1720 = scalar_lea.sflag [#allocation5], %s1719
          %s1721 = sand.u32 %s474, 1
          %s1722 = smul.addr %s1721, 8
          %s1723 = scalar_lea.vmem [#allocation4], %s1722
          %1724 = dma.done %s1720, 128
        $region108: #{zero_model_forward.1} parent=103 // pred_fallthru
          _
      $region104: #{zero_model_forward.1} parent=5 // pred_fallthru
        _
    $region6: #{zero_model_forward.1} parent=1 // loop_footer
      %s30 = sadd.s32 1, %s26
    $region7: #{zero_model_forward.1} parent=1 // loop_footer_branch
      %25 = sbr.rel target = $region3
    $region8: #{zero_model_forward.1} parent=1 // loop_exit
      _
    %1725 = vsyncpa [#allocation5], 1
    %s1726 = scalar_lea.sflag [#allocation5], 1
    %1727 = vsyncpa %s1726, 1

</llo_original>
